<compile_context>
chip_gen: v6e
topology: v6e:2x2x1
jax: 0.10.0
libtpu: 0.0.40
codegen_flags: <defaults>
</compile_context>

<pallas_src>
import functools
import math

import numpy as np
import jax
import jax.numpy as jnp
from jax import lax
from jax.experimental import pallas as pl
from jax.experimental.pallas import tpu as pltpu

# Model dims (small, Llama-like)
HIDDEN = 128
NUM_HEADS = 4
HEAD_DIM = HIDDEN // NUM_HEADS          # 32
INTER = 256
EPS = 1e-6
ROPE_THETA = 10000.0


# --------------------------------------------------------------------------
# In-kernel helper
# --------------------------------------------------------------------------
def _rmsnorm(x, w):
    # x: (S, H) fp32, w: (1, H) fp32
    var = jnp.mean(x * x, axis=-1, keepdims=True)
    return x * lax.rsqrt(var + EPS) * w


# --------------------------------------------------------------------------
# Fused decoder-layer kernel: one grid step = one batch element.
#   x  -> RMSNorm -> fused QKV(+RoPE-rot) proj -> RoPE -> attention -> Wo -> +x
#      -> RMSNorm -> fused gate/up proj -> SwiGLU -> down proj -> +x
# --------------------------------------------------------------------------
def decoder_layer_kernel(x_ref, mask_ref, cos_ref, sin_ref,
                         wqkv_ref, wo_ref, wgu_ref, wd_ref,
                         ln1_ref, ln2_ref, o_ref):
    f32 = jnp.float32
    bf16 = jnp.bfloat16
    HD = HEAD_DIM

    x = x_ref[...]                # (S, H)    fp32
    mask = mask_ref[...]          # (S, S)    fp32 additive
    cos = cos_ref[...]            # (S, HD)   fp32
    sin = sin_ref[...]            # (S, HD)   fp32
    S = x.shape[0]

    # ---------------- attention block ----------------
    xn = _rmsnorm(x, ln1_ref[...])                                  # fp32
    xnb = jnp.broadcast_to(xn.astype(bf16)[None], (NUM_HEADS, S, HIDDEN))

    # Fused per-head projection: columns are [q | q@R | k | k@R | v]
    # where R is the rotate_half signed permutation folded into the weights.
    qkvr = lax.dot_general(
        xnb, wqkv_ref[...],
        dimension_numbers=(((2,), (1,)), ((0,), (0,))),
        preferred_element_type=f32)                                  # (NH, S, 5*HD)

    cos_b = cos[None]             # (1, S, HD) -> broadcasts over heads
    sin_b = sin[None]
    q = qkvr[..., 0 * HD:1 * HD] * cos_b + qkvr[..., 1 * HD:2 * HD] * sin_b
    k = qkvr[..., 2 * HD:3 * HD] * cos_b + qkvr[..., 3 * HD:4 * HD] * sin_b
    v = qkvr[..., 4 * HD:5 * HD]                                     # (NH, S, HD)

    scale = 1.0 / math.sqrt(HD)
    # scores: contract head_dim of both operands (no .T / transpose)
    s = lax.dot_general(
        q.astype(bf16), k.astype(bf16),
        dimension_numbers=(((2,), (2,)), ((0,), (0,))),
        preferred_element_type=f32)                                  # (NH, S, S)
    s = s * scale + mask[None]
    s = s - jnp.max(s, axis=-1, keepdims=True)
    p = jnp.exp(s)
    denom = jnp.sum(p, axis=-1, keepdims=True)                       # (NH, S, 1)

    pv = lax.dot_general(
        p.astype(bf16), v.astype(bf16),
        dimension_numbers=(((2,), (1,)), ((0,), (0,))),
        preferred_element_type=f32)                                  # (NH, S, HD)
    # Normalize the (NH,S,HD) output, not the (NH,S,S) probs; EUP reciprocal.
    pv = pv * pl.reciprocal(denom, approx=True)

    # Per-head Wo accumulation (folds the head concat into the projection).
    oh = lax.dot_general(
        pv.astype(bf16), wo_ref[...],
        dimension_numbers=(((2,), (1,)), ((0,), (0,))),
        preferred_element_type=f32)                                  # (NH, S, H)
    x = x + jnp.sum(oh, axis=0)                                      # residual

    # ---------------- MLP block ----------------
    xn2 = _rmsnorm(x, ln2_ref[...]).astype(bf16)
    gu = jnp.dot(xn2, wgu_ref[...], preferred_element_type=f32)      # (S, 2*INTER)
    g = gu[:, :INTER]
    u = gu[:, INTER:]
    h = (g * jax.nn.sigmoid(g)) * u                                  # silu(g)*u, fp32
    d = jnp.dot(h.astype(bf16), wd_ref[...], preferred_element_type=f32)
    o_ref[...] = (x + d).astype(o_ref.dtype)                         # residual


# --------------------------------------------------------------------------
# Weight fusion (wrapper-side, one-time)
# --------------------------------------------------------------------------
def _rotate_half_matrix():
    # Signed block-diagonal permutation R with (q @ R) == rotate_half_per_head(q).
    R = np.zeros((HIDDEN, HIDDEN), np.float32)
    half = HEAD_DIM // 2
    for h in range(NUM_HEADS):
        base = h * HEAD_DIM
        for j in range(half):
            R[base + j + half, base + j] = -1.0    # out[:, j]      = -q[:, j+half]
            R[base + j, base + j + half] = 1.0     # out[:, j+half] =  q[:, j]
    return jnp.asarray(R)


def fuse_params(params, dtype=jnp.bfloat16):
    R = _rotate_half_matrix()
    wq, wk, wv, wo = params["wq"], params["wk"], params["wv"], params["wo"]
    wqr = wq @ R      # exact: signed column permutation of wq
    wkr = wk @ R

    def per_head(w):  # (H, H) -> (NUM_HEADS, H, HEAD_DIM)
        return w.reshape(HIDDEN, NUM_HEADS, HEAD_DIM).transpose(1, 0, 2)

    wqkv = jnp.concatenate(
        [per_head(wq), per_head(wqr), per_head(wk), per_head(wkr), per_head(wv)],
        axis=-1).astype(dtype)                                # (NH, H, 5*HEAD_DIM)
    wo3 = wo.reshape(NUM_HEADS, HEAD_DIM, HIDDEN).astype(dtype)
    wgu = jnp.concatenate([params["wg"], params["wu"]], axis=1).astype(dtype)
    wd = params["wd"].astype(dtype)
    return {
        "wqkv": wqkv, "wo3": wo3, "wgu": wgu, "wd": wd,
        "ln1": params["ln1"].astype(jnp.float32),
        "ln2": params["ln2"].astype(jnp.float32),
    }


# --------------------------------------------------------------------------
# Wrapper: full decoder layer + the pipe tuple re-packing.
# --------------------------------------------------------------------------
@functools.partial(jax.jit, static_argnames=())
def llama_decoder_layer(hidden_states, attention_mask, position_ids, fused):
    B, S, H = hidden_states.shape

    # Rotary cos/sin tables from position_ids (plain-JAX glue).
    inv_freq = 1.0 / (ROPE_THETA ** (jnp.arange(0, HEAD_DIM, 2, dtype=jnp.float32)
                                     / HEAD_DIM))                    # (HD/2,)
    freqs = position_ids.astype(jnp.float32)[..., None] * inv_freq   # (B,S,HD/2)
    emb = jnp.concatenate([freqs, freqs], axis=-1)                   # (B,S,HD)
    cos = jnp.cos(emb)
    sin = jnp.sin(emb)

    # Mask: squeeze head dim; do NOT replicate a shared (1,1,S,S) mask per batch.
    mask3 = attention_mask.reshape(attention_mask.shape[0], S, S).astype(jnp.float32)
    if mask3.shape[0] == 1:
        mask_idx = lambda b: (0, 0, 0)
    else:
        mask_idx = lambda b: (b, 0, 0)

    def batch_spec(shape):
        # Leading size-1 batch dim squeezed out of the kernel ref.
        return pl.BlockSpec((None,) + shape, lambda b: (b,) + (0,) * len(shape))

    def full_spec(arr):
        nd = arr.ndim
        return pl.BlockSpec(arr.shape, lambda b, _nd=nd: (0,) * _nd)

    out = pl.pallas_call(
        decoder_layer_kernel,
        out_shape=jax.ShapeDtypeStruct((B, S, H), hidden_states.dtype),
        grid=(B,),
        in_specs=[
            batch_spec((S, H)),                        # hidden_states
            pl.BlockSpec((None, S, S), mask_idx),      # additive attention mask
            batch_spec((S, HEAD_DIM)),                 # cos
            batch_spec((S, HEAD_DIM)),                 # sin
            full_spec(fused["wqkv"]),                  # fused q/qR/k/kR/v, per head
            full_spec(fused["wo3"]),                   # Wo, per head
            full_spec(fused["wgu"]),                   # fused gate|up
            full_spec(fused["wd"]),                    # down
            full_spec(fused["ln1"]),                   # input_layernorm weight
            full_spec(fused["ln2"]),                   # post_attention_layernorm
        ],
        out_specs=batch_spec((S, H)),
        compiler_params=pltpu.CompilerParams(dimension_semantics=("parallel",)),
    )(hidden_states, mask3, cos, sin,
      fused["wqkv"], fused["wo3"], fused["wgu"], fused["wd"],
      fused["ln1"], fused["ln2"])
    return out


def llama_decoder_layer_pipe(inputs, fused_params):
    """Mirrors LlamaDecoderLayerPipe.forward: tuple in -> tuple out."""
    hidden_states, attention_mask, position_ids, labels = inputs
    # TODO(synk): mlp_offloaded_to_cpu / register_hook / move_data_to_device
    # host-memory bookkeeping has no Pallas/device equivalent; omitted.
    new_hidden = llama_decoder_layer(hidden_states, attention_mask, position_ids,
                                     fused_params)
    return (new_hidden, attention_mask, position_ids, labels)


# --------------------------------------------------------------------------
# Pure-JAX fp32 reference (same math, unfused weights) for correctness check.
# --------------------------------------------------------------------------
def ref_decoder_layer(x, mask, position_ids, params):
    def rmsnorm(v, w):
        var = jnp.mean(v * v, axis=-1, keepdims=True)
        return v * lax.rsqrt(var + EPS) * w

    B, S, H = x.shape
    inv_freq = 1.0 / (ROPE_THETA ** (jnp.arange(0, HEAD_DIM, 2, dtype=jnp.float32)
                                     / HEAD_DIM))
    freqs = position_ids.astype(jnp.float32)[..., None] * inv_freq
    emb = jnp.concatenate([freqs, freqs], axis=-1)
    cos, sin = jnp.cos(emb), jnp.sin(emb)                 # (B,S,HD)

    xn = rmsnorm(x, params["ln1"][0])
    q = xn @ params["wq"]
    k = xn @ params["wk"]
    v = xn @ params["wv"]
    q = q.reshape(B, S, NUM_HEADS, HEAD_DIM)
    k = k.reshape(B, S, NUM_HEADS, HEAD_DIM)
    v = v.reshape(B, S, NUM_HEADS, HEAD_DIM)

    def rot_half(t):
        h = HEAD_DIM // 2
        return jnp.concatenate([-t[..., h:], t[..., :h]], axis=-1)

    c = cos[:, :, None, :]
    s = sin[:, :, None, :]
    q = q * c + rot_half(q) * s
    k = k * c + rot_half(k) * s

    scores = jnp.einsum("bqhd,bkhd->bhqk", q, k) / math.sqrt(HEAD_DIM)
    scores = scores + mask
    probs = jax.nn.softmax(scores, axis=-1)
    attn = jnp.einsum("bhqk,bkhd->bqhd", probs, v).reshape(B, S, H)
    x = x + attn @ params["wo"]

    xn = rmsnorm(x, params["ln2"][0])
    g = xn @ params["wg"]
    u = xn @ params["wu"]
    x = x + ((g * jax.nn.sigmoid(g)) * u) @ params["wd"]
    return x


# --------------------------------------------------------------------------
def init_params(key):
    ks = jax.random.split(key, 8)
    scale = 0.02
    return {
        "wq": scale * jax.random.normal(ks[0], (HIDDEN, HIDDEN), jnp.float32),
        "wk": scale * jax.random.normal(ks[1], (HIDDEN, HIDDEN), jnp.float32),
        "wv": scale * jax.random.normal(ks[2], (HIDDEN, HIDDEN), jnp.float32),
        "wo": scale * jax.random.normal(ks[3], (HIDDEN, HIDDEN), jnp.float32),
        "wg": scale * jax.random.normal(ks[4], (HIDDEN, INTER), jnp.float32),
        "wu": scale * jax.random.normal(ks[5], (HIDDEN, INTER), jnp.float32),
        "wd": scale * jax.random.normal(ks[6], (INTER, HIDDEN), jnp.float32),
        "ln1": jnp.ones((1, HIDDEN), jnp.float32),
        "ln2": jnp.ones((1, HIDDEN), jnp.float32),
    }


if __name__ == "__main__":
    key = jax.random.PRNGKey(0)
    k_h, k_p = jax.random.split(key)

    B, S = 2, 8
    hidden_states = jax.random.normal(k_h, (B, S, HIDDEN), jnp.float32)
    position_ids = jnp.broadcast_to(jnp.arange(S, dtype=jnp.int32), (B, S))
    causal = jnp.where(jnp.tril(jnp.ones((S, S), dtype=bool)), 0.0, -1e9)
    attention_mask = jnp.broadcast_to(causal, (B, 1, S, S)).astype(jnp.float32)
    labels = jnp.zeros((B, S), jnp.int32)

    params = init_params(k_p)
    fused = fuse_params(params)

    out = llama_decoder_layer_pipe(
        (hidden_states, attention_mask, position_ids, labels), fused)
    out = jax.block_until_ready(out)

    # Shape / tuple contract matches the PyTorch pipe module.
    assert out[0].shape == hidden_states.shape
    assert out[1] is attention_mask and out[2] is position_ids and out[3] is labels

    ref = ref_decoder_layer(hidden_states, attention_mask, position_ids, params)
    max_err = float(jnp.max(jnp.abs(out[0] - ref)))
    # bf16 matmul inputs + approx reciprocal -> relaxed (but tight) tolerance.
    assert max_err < 2e-2, f"mismatch vs reference: {max_err}"

    print("KERNEL_OK")
</pallas_src>

<mosaic_0001>
module attributes {stable_mosaic.version = 11 : i64} {
  func.func @decoder_layer_kernel(%arg0: i32, %arg1: memref<1x8x128xf32, #tpu.memory_space<vmem>>, %arg2: memref<1x8x8xf32, #tpu.memory_space<vmem>>, %arg3: memref<1x8x32xf32, #tpu.memory_space<vmem>>, %arg4: memref<1x8x32xf32, #tpu.memory_space<vmem>>, %arg5: memref<4x128x160xbf16, #tpu.memory_space<vmem>>, %arg6: memref<4x32x128xbf16, #tpu.memory_space<vmem>>, %arg7: memref<128x512xbf16, #tpu.memory_space<vmem>>, %arg8: memref<256x128xbf16, #tpu.memory_space<vmem>>, %arg9: memref<1x128xf32, #tpu.memory_space<vmem>>, %arg10: memref<1x128xf32, #tpu.memory_space<vmem>>, %arg11: memref<1x8x128xf32, #tpu.memory_space<vmem>>) attributes {dimension_semantics = [#tpu.dimension_semantics<parallel>], iteration_bounds = array<i64: 2>, scalar_prefetch = 0 : i64, scratch_operands = 0 : i64, tpu.core_type = #tpu.core_type<tc>, window_params = [{transform_indices = @transform_0, window_bounds = array<i64: 1, 8, 128>}, {transform_indices = @transform_1, window_bounds = array<i64: 1, 8, 8>}, {transform_indices = @transform_2, window_bounds = array<i64: 1, 8, 32>}, {transform_indices = @transform_3, window_bounds = array<i64: 1, 8, 32>}, {pipeline_mode = #tpu.pipeline_mode<synchronous>, transform_indices = @transform_4, window_bounds = array<i64: 4, 128, 160>}, {pipeline_mode = #tpu.pipeline_mode<synchronous>, transform_indices = @transform_5, window_bounds = array<i64: 4, 32, 128>}, {pipeline_mode = #tpu.pipeline_mode<synchronous>, transform_indices = @transform_6, window_bounds = array<i64: 128, 512>}, {pipeline_mode = #tpu.pipeline_mode<synchronous>, transform_indices = @transform_7, window_bounds = array<i64: 256, 128>}, {pipeline_mode = #tpu.pipeline_mode<synchronous>, transform_indices = @transform_8, window_bounds = array<i64: 1, 128>}, {pipeline_mode = #tpu.pipeline_mode<synchronous>, transform_indices = @transform_9, window_bounds = array<i64: 1, 128>}, {transform_indices = @transform_10, window_bounds = array<i64: 1, 8, 128>}]} {
    %c0 = arith.constant 0 : index
    %c0_0 = arith.constant 0 : index
    %c0_1 = arith.constant 0 : index
    %0 = vector.load %arg1[%c0, %c0_0, %c0_1] : memref<1x8x128xf32, #tpu.memory_space<vmem>>, vector<1x8x128xf32>
    %1 = vector.shape_cast %0 : vector<1x8x128xf32> to vector<8x128xf32>
    %c0_2 = arith.constant 0 : index
    %c0_3 = arith.constant 0 : index
    %c0_4 = arith.constant 0 : index
    %2 = vector.load %arg2[%c0_2, %c0_3, %c0_4] : memref<1x8x8xf32, #tpu.memory_space<vmem>>, vector<1x8x8xf32>
    %3 = vector.shape_cast %2 : vector<1x8x8xf32> to vector<8x8xf32>
    %c0_5 = arith.constant 0 : index
    %c0_6 = arith.constant 0 : index
    %c0_7 = arith.constant 0 : index
    %4 = vector.load %arg3[%c0_5, %c0_6, %c0_7] : memref<1x8x32xf32, #tpu.memory_space<vmem>>, vector<1x8x32xf32>
    %5 = vector.shape_cast %4 : vector<1x8x32xf32> to vector<8x32xf32>
    %c0_8 = arith.constant 0 : index
    %c0_9 = arith.constant 0 : index
    %c0_10 = arith.constant 0 : index
    %6 = vector.load %arg4[%c0_8, %c0_9, %c0_10] : memref<1x8x32xf32, #tpu.memory_space<vmem>>, vector<1x8x32xf32>
    %7 = vector.shape_cast %6 : vector<1x8x32xf32> to vector<8x32xf32>
    %c0_11 = arith.constant 0 : index
    %c0_12 = arith.constant 0 : index
    %8 = vector.load %arg9[%c0_11, %c0_12] : memref<1x128xf32, #tpu.memory_space<vmem>>, vector<1x128xf32>
    %9 = arith.mulf %1, %1 : vector<8x128xf32>
    %cst = arith.constant dense<0.000000e+00> : vector<8xf32>
    %10 = vector.multi_reduction <add>, %9, %cst [1] : vector<8x128xf32> to vector<8xf32>
    %11 = vector.shape_cast %10 : vector<8xf32> to vector<8x1xf32>
    %cst_13 = arith.constant 1.280000e+02 : f32
    %12 = vector.broadcast %cst_13 : f32 to vector<8x1xf32>
    %13 = arith.divf %11, %12 : vector<8x1xf32>
    %cst_14 = arith.constant 9.99999997E-7 : f32
    %14 = vector.broadcast %cst_14 : f32 to vector<8x1xf32>
    %15 = arith.addf %13, %14 : vector<8x1xf32>
    %16 = math.rsqrt %15 : vector<8x1xf32>
    %17 = vector.broadcast %16 : vector<8x1xf32> to vector<8x128xf32>
    %18 = arith.mulf %1, %17 : vector<8x128xf32>
    %19 = vector.broadcast %8 : vector<1x128xf32> to vector<8x128xf32>
    %20 = arith.mulf %18, %19 : vector<8x128xf32>
    %21 = arith.truncf %20 : vector<8x128xf32> to vector<8x128xbf16>
    %22 = vector.shape_cast %21 : vector<8x128xbf16> to vector<1x8x128xbf16>
    %23 = vector.shape_cast %22 : vector<1x8x128xbf16> to vector<1x8x128xbf16>
    %24 = vector.broadcast %23 : vector<1x8x128xbf16> to vector<4x8x128xbf16>
    %c0_15 = arith.constant 0 : index
    %c0_16 = arith.constant 0 : index
    %c0_17 = arith.constant 0 : index
    %25 = vector.load %arg5[%c0_15, %c0_16, %c0_17] : memref<4x128x160xbf16, #tpu.memory_space<vmem>>, vector<4x128x160xbf16>
    %cst_18 = arith.constant dense<0.000000e+00> : vector<4x8x160xf32>
    %26 = tpu.matmul %24, %25, %cst_18 {dimension_numbers = #tpu.dot_dimension_numbers<[2], [1], [1], [2], [0, 0, 0, 1, 1, 2], [0], [0]>} : vector<4x8x128xbf16>, vector<4x128x160xbf16>, vector<4x8x160xf32> -> vector<4x8x160xf32>
    %27 = vector.shape_cast %5 : vector<8x32xf32> to vector<1x8x32xf32>
    %28 = vector.shape_cast %7 : vector<8x32xf32> to vector<1x8x32xf32>
    %29 = vector.extract_strided_slice %26 {offsets = [0, 0, 0], sizes = [4, 8, 32], strides = [1, 1, 1]} : vector<4x8x160xf32> to vector<4x8x32xf32>
    %30 = vector.broadcast %27 : vector<1x8x32xf32> to vector<4x8x32xf32>
    %31 = arith.mulf %29, %30 : vector<4x8x32xf32>
    %32 = vector.extract_strided_slice %26 {offsets = [0, 0, 32], sizes = [4, 8, 32], strides = [1, 1, 1]} : vector<4x8x160xf32> to vector<4x8x32xf32>
    %33 = vector.broadcast %28 : vector<1x8x32xf32> to vector<4x8x32xf32>
    %34 = arith.mulf %32, %33 : vector<4x8x32xf32>
    %35 = arith.addf %31, %34 : vector<4x8x32xf32>
    %36 = vector.extract_strided_slice %26 {offsets = [0, 0, 64], sizes = [4, 8, 32], strides = [1, 1, 1]} : vector<4x8x160xf32> to vector<4x8x32xf32>
    %37 = vector.broadcast %27 : vector<1x8x32xf32> to vector<4x8x32xf32>
    %38 = arith.mulf %36, %37 : vector<4x8x32xf32>
    %39 = vector.extract_strided_slice %26 {offsets = [0, 0, 96], sizes = [4, 8, 32], strides = [1, 1, 1]} : vector<4x8x160xf32> to vector<4x8x32xf32>
    %40 = vector.broadcast %28 : vector<1x8x32xf32> to vector<4x8x32xf32>
    %41 = arith.mulf %39, %40 : vector<4x8x32xf32>
    %42 = arith.addf %38, %41 : vector<4x8x32xf32>
    %43 = vector.extract_strided_slice %26 {offsets = [0, 0, 128], sizes = [4, 8, 32], strides = [1, 1, 1]} : vector<4x8x160xf32> to vector<4x8x32xf32>
    %44 = arith.truncf %35 : vector<4x8x32xf32> to vector<4x8x32xbf16>
    %45 = arith.truncf %42 : vector<4x8x32xf32> to vector<4x8x32xbf16>
    %cst_19 = arith.constant dense<0.000000e+00> : vector<4x8x8xf32>
    %46 = tpu.matmul %44, %45, %cst_19 {dimension_numbers = #tpu.dot_dimension_numbers<[2], [2], [1], [1], [0, 0, 0, 1, 1, 1], [0], [0]>} : vector<4x8x32xbf16>, vector<4x8x32xbf16>, vector<4x8x8xf32> -> vector<4x8x8xf32>
    %cst_20 = arith.constant 0.176776692 : f32
    %47 = vector.broadcast %cst_20 : f32 to vector<4x8x8xf32>
    %48 = arith.mulf %46, %47 : vector<4x8x8xf32>
    %49 = vector.shape_cast %3 : vector<8x8xf32> to vector<1x8x8xf32>
    %50 = vector.broadcast %49 : vector<1x8x8xf32> to vector<4x8x8xf32>
    %51 = arith.addf %48, %50 : vector<4x8x8xf32>
    %cst_21 = arith.constant dense<0xFF800000> : vector<4x8xf32>
    %52 = vector.multi_reduction <maximumf>, %51, %cst_21 [2] : vector<4x8x8xf32> to vector<4x8xf32>
    %53 = vector.shape_cast %52 : vector<4x8xf32> to vector<4x8x1xf32>
    %54 = vector.broadcast %53 : vector<4x8x1xf32> to vector<4x8x8xf32>
    %55 = arith.subf %51, %54 : vector<4x8x8xf32>
    %56 = math.exp %55 : vector<4x8x8xf32>
    %cst_22 = arith.constant dense<0.000000e+00> : vector<4x8xf32>
    %57 = vector.multi_reduction <add>, %56, %cst_22 [2] : vector<4x8x8xf32> to vector<4x8xf32>
    %58 = vector.shape_cast %57 : vector<4x8xf32> to vector<4x8x1xf32>
    %59 = arith.truncf %56 : vector<4x8x8xf32> to vector<4x8x8xbf16>
    %60 = arith.truncf %43 : vector<4x8x32xf32> to vector<4x8x32xbf16>
    %cst_23 = arith.constant dense<0.000000e+00> : vector<4x8x32xf32>
    %61 = tpu.matmul %59, %60, %cst_23 {dimension_numbers = #tpu.dot_dimension_numbers<[2], [1], [1], [2], [0, 0, 0, 1, 1, 2], [0], [0]>} : vector<4x8x8xbf16>, vector<4x8x32xbf16>, vector<4x8x32xf32> -> vector<4x8x32xf32>
    %62 = tpu.reciprocal %58 {approx = true} : vector<4x8x1xf32> -> vector<4x8x1xf32>
    %63 = vector.broadcast %62 : vector<4x8x1xf32> to vector<4x8x32xf32>
    %64 = arith.mulf %61, %63 : vector<4x8x32xf32>
    %65 = arith.truncf %64 : vector<4x8x32xf32> to vector<4x8x32xbf16>
    %c0_24 = arith.constant 0 : index
    %c0_25 = arith.constant 0 : index
    %c0_26 = arith.constant 0 : index
    %66 = vector.load %arg6[%c0_24, %c0_25, %c0_26] : memref<4x32x128xbf16, #tpu.memory_space<vmem>>, vector<4x32x128xbf16>
    %cst_27 = arith.constant dense<0.000000e+00> : vector<4x8x128xf32>
    %67 = tpu.matmul %65, %66, %cst_27 {dimension_numbers = #tpu.dot_dimension_numbers<[2], [1], [1], [2], [0, 0, 0, 1, 1, 2], [0], [0]>} : vector<4x8x32xbf16>, vector<4x32x128xbf16>, vector<4x8x128xf32> -> vector<4x8x128xf32>
    %cst_28 = arith.constant dense<0.000000e+00> : vector<8x128xf32>
    %68 = vector.multi_reduction <add>, %67, %cst_28 [0] : vector<4x8x128xf32> to vector<8x128xf32>
    %69 = arith.addf %1, %68 : vector<8x128xf32>
    %c0_29 = arith.constant 0 : index
    %c0_30 = arith.constant 0 : index
    %70 = vector.load %arg10[%c0_29, %c0_30] : memref<1x128xf32, #tpu.memory_space<vmem>>, vector<1x128xf32>
    %71 = arith.mulf %69, %69 : vector<8x128xf32>
    %cst_31 = arith.constant dense<0.000000e+00> : vector<8xf32>
    %72 = vector.multi_reduction <add>, %71, %cst_31 [1] : vector<8x128xf32> to vector<8xf32>
    %73 = vector.shape_cast %72 : vector<8xf32> to vector<8x1xf32>
    %cst_32 = arith.constant 1.280000e+02 : f32
    %74 = vector.broadcast %cst_32 : f32 to vector<8x1xf32>
    %75 = arith.divf %73, %74 : vector<8x1xf32>
    %cst_33 = arith.constant 9.99999997E-7 : f32
    %76 = vector.broadcast %cst_33 : f32 to vector<8x1xf32>
    %77 = arith.addf %75, %76 : vector<8x1xf32>
    %78 = math.rsqrt %77 : vector<8x1xf32>
    %79 = vector.broadcast %78 : vector<8x1xf32> to vector<8x128xf32>
    %80 = arith.mulf %69, %79 : vector<8x128xf32>
    %81 = vector.broadcast %70 : vector<1x128xf32> to vector<8x128xf32>
    %82 = arith.mulf %80, %81 : vector<8x128xf32>
    %83 = arith.truncf %82 : vector<8x128xf32> to vector<8x128xbf16>
    %c0_34 = arith.constant 0 : index
    %c0_35 = arith.constant 0 : index
    %84 = vector.load %arg7[%c0_34, %c0_35] : memref<128x512xbf16, #tpu.memory_space<vmem>>, vector<128x512xbf16>
    %cst_36 = arith.constant dense<0.000000e+00> : vector<8x512xf32>
    %85 = tpu.matmul %83, %84, %cst_36 {dimension_numbers = #tpu.dot_dimension_numbers<[1], [0], [0], [1], [0, 0, 1, 1], [], []>} : vector<8x128xbf16>, vector<128x512xbf16>, vector<8x512xf32> -> vector<8x512xf32>
    %86 = vector.extract_strided_slice %85 {offsets = [0, 0], sizes = [8, 256], strides = [1, 1]} : vector<8x512xf32> to vector<8x256xf32>
    %87 = vector.extract_strided_slice %85 {offsets = [0, 256], sizes = [8, 256], strides = [1, 1]} : vector<8x512xf32> to vector<8x256xf32>
    %88 = arith.negf %86 : vector<8x256xf32>
    %89 = math.exp %88 : vector<8x256xf32>
    %cst_37 = arith.constant 1.000000e+00 : f32
    %90 = vector.broadcast %cst_37 : f32 to vector<8x256xf32>
    %91 = arith.addf %90, %89 : vector<8x256xf32>
    %92 = arith.divf %90, %91 : vector<8x256xf32>
    %93 = arith.mulf %86, %92 : vector<8x256xf32>
    %94 = arith.mulf %93, %87 : vector<8x256xf32>
    %95 = arith.truncf %94 : vector<8x256xf32> to vector<8x256xbf16>
    %c0_38 = arith.constant 0 : index
    %c0_39 = arith.constant 0 : index
    %96 = vector.load %arg8[%c0_38, %c0_39] : memref<256x128xbf16, #tpu.memory_space<vmem>>, vector<256x128xbf16>
    %cst_40 = arith.constant dense<0.000000e+00> : vector<8x128xf32>
    %97 = tpu.matmul %95, %96, %cst_40 {dimension_numbers = #tpu.dot_dimension_numbers<[1], [0], [0], [1], [0, 0, 1, 1], [], []>} : vector<8x256xbf16>, vector<256x128xbf16>, vector<8x128xf32> -> vector<8x128xf32>
    %98 = arith.addf %69, %97 : vector<8x128xf32>
    %c0_41 = arith.constant 0 : index
    %c0_42 = arith.constant 0 : index
    %c0_43 = arith.constant 0 : index
    %99 = vector.load %arg11[%c0_41, %c0_42, %c0_43] : memref<1x8x128xf32, #tpu.memory_space<vmem>>, vector<1x8x128xf32>
    %100 = vector.shape_cast %99 : vector<1x8x128xf32> to vector<8x128xf32>
    %101 = vector.shape_cast %98 : vector<8x128xf32> to vector<1x8x128xf32>
    tpu.vector_store %arg11[%c0_41, %c0_42, %c0_43], %101 {strides = array<i32>} : memref<1x8x128xf32, #tpu.memory_space<vmem>>, vector<1x8x128xf32>,
    return
  }
  func.func @transform_0(%arg0: i32) -> (i32, i32, i32) {
    %c0_i32 = arith.constant 0 : i32
    %c0_i32_0 = arith.constant 0 : i32
    %c0_i32_1 = arith.constant 0 : i32
    return %arg0, %c0_i32, %c0_i32_0 : i32, i32, i32
  }
  func.func @transform_1(%arg0: i32) -> (i32, i32, i32) {
    %c0_i32 = arith.constant 0 : i32
    %c0_i32_0 = arith.constant 0 : i32
    %c0_i32_1 = arith.constant 0 : i32
    return %arg0, %c0_i32, %c0_i32_0 : i32, i32, i32
  }
  func.func @transform_2(%arg0: i32) -> (i32, i32, i32) {
    %c0_i32 = arith.constant 0 : i32
    %c0_i32_0 = arith.constant 0 : i32
    %c0_i32_1 = arith.constant 0 : i32
    return %arg0, %c0_i32, %c0_i32_0 : i32, i32, i32
  }
  func.func @transform_3(%arg0: i32) -> (i32, i32, i32) {
    %c0_i32 = arith.constant 0 : i32
    %c0_i32_0 = arith.constant 0 : i32
    %c0_i32_1 = arith.constant 0 : i32
    return %arg0, %c0_i32, %c0_i32_0 : i32, i32, i32
  }
  func.func @transform_4(%arg0: i32) -> (i32, i32, i32) {
    %c0_i32 = arith.constant 0 : i32
    %c0_i32_0 = arith.constant 0 : i32
    %c0_i32_1 = arith.constant 0 : i32
    %c0_i32_2 = arith.constant 0 : i32
    return %c0_i32, %c0_i32_0, %c0_i32_1 : i32, i32, i32
  }
  func.func @transform_5(%arg0: i32) -> (i32, i32, i32) {
    %c0_i32 = arith.constant 0 : i32
    %c0_i32_0 = arith.constant 0 : i32
    %c0_i32_1 = arith.constant 0 : i32
    %c0_i32_2 = arith.constant 0 : i32
    return %c0_i32, %c0_i32_0, %c0_i32_1 : i32, i32, i32
  }
  func.func @transform_6(%arg0: i32) -> (i32, i32) {
    %c0_i32 = arith.constant 0 : i32
    %c0_i32_0 = arith.constant 0 : i32
    %c0_i32_1 = arith.constant 0 : i32
    return %c0_i32, %c0_i32_0 : i32, i32
  }
  func.func @transform_7(%arg0: i32) -> (i32, i32) {
    %c0_i32 = arith.constant 0 : i32
    %c0_i32_0 = arith.constant 0 : i32
    %c0_i32_1 = arith.constant 0 : i32
    return %c0_i32, %c0_i32_0 : i32, i32
  }
  func.func @transform_8(%arg0: i32) -> (i32, i32) {
    %c0_i32 = arith.constant 0 : i32
    %c0_i32_0 = arith.constant 0 : i32
    %c0_i32_1 = arith.constant 0 : i32
    return %c0_i32, %c0_i32_0 : i32, i32
  }
  func.func @transform_9(%arg0: i32) -> (i32, i32) {
    %c0_i32 = arith.constant 0 : i32
    %c0_i32_0 = arith.constant 0 : i32
    %c0_i32_1 = arith.constant 0 : i32
    return %c0_i32, %c0_i32_0 : i32, i32
  }
  func.func @transform_10(%arg0: i32) -> (i32, i32, i32) {
    %c0_i32 = arith.constant 0 : i32
    %c0_i32_0 = arith.constant 0 : i32
    %c0_i32_1 = arith.constant 0 : i32
    return %arg0, %c0_i32, %c0_i32_0 : i32, i32, i32
  }
}

</mosaic_0001>

<llo_original>
// kernel: llama_decoder_layer.1
$region0: #{llama_decoder_layer.1}
  #allocation0 [shape = 'u32[]', space=smem, size = 0x4, offset = 0x4, fixed_abs, tag = 'smem constant byte address 0x4 - core index']
  #allocation1 [shape = 'u32[144,128]{1,0:T(1,128)}', space=vmem, size = 0x12000, scoped, tag = 'internal scratch']
  %s0 = inlined_call_operand.vmem [shape: f32[2,8,128], index: 0, kind: input, shape index: {}]
  %s1 = inlined_call_operand.vmem [shape: f32[2,8,8], index: 1, kind: input, shape index: {}]
  %s2 = inlined_call_operand.vmem [shape: f32[2,8,32], index: 2, kind: input, shape index: {}]
  %s3 = inlined_call_operand.vmem [shape: f32[2,8,32], index: 3, kind: input, shape index: {}]
  %s4 = inlined_call_operand.vmem [shape: bf16[4,128,160], index: 4, kind: input, shape index: {}]
  %s5 = inlined_call_operand.vmem [shape: bf16[4,32,128], index: 5, kind: input, shape index: {}]
  %s6 = inlined_call_operand.vmem [shape: bf16[128,512], index: 6, kind: input, shape index: {}]
  %s7 = inlined_call_operand.vmem [shape: bf16[256,128], index: 7, kind: input, shape index: {}]
  %s8 = inlined_call_operand.vmem [shape: f32[1,128], index: 8, kind: input, shape index: {}]
  %s9 = inlined_call_operand.vmem [shape: f32[1,128], index: 9, kind: input, shape index: {}]
  %s10 = inlined_call_operand.hbm [shape: f32[2,8,128], index: 10, kind: output, shape index: {}]
  %s11 = sld [smem:[#allocation0]]
  $region73: #{llama_decoder_layer.1} parent=0
    _
  %s13 = ssub.s32 1, %s11
  %s14 = scalar_select 0, %s13, %s11
  $region1: #{llama_decoder_layer.1} parent=0
    #allocation2 [shape = 'u8[8192]{0}', space=vmem, size = 0x2000, scoped, tag = 'output window, operand 0']
    #allocation3 [shape = 's32[2]{0}', space=sflag, size = 0x8, scoped, tag = 'scoped memory for llama_decoder_layer.1']
    %15 = vsyncpa [#allocation3], 0
    %s16 = scalar_lea.sflag [#allocation3], 1
    %17 = vsyncpa %s16, 0
    loop: start=0, step=1, limit=4
    $region2: #{llama_decoder_layer.1} parent=1 // loop_pre_header
      _
    $region3: #{llama_decoder_layer.1} parent=1 // loop_header
      %s19 = sphi 0, %s23
      %p20 = scmp.ge.s32.totalorder %s19, 4
      %s29 = sphi 0, %s31
      %s32 = sphi 0, %s29
      %s33 = sphi 0, %s32
      %s49 = sphi 0, %s33
      %s55 = sphi 0, %s57
      %s58 = sphi 0, %s55
      %s59 = sphi 0, %s58
      %s75 = sphi 0, %s59
      %s81 = sphi 0, %s83
      %s84 = sphi 0, %s81
      %s85 = sphi 0, %s84
      %s101 = sphi 0, %s85
      %s107 = sphi 0, %s109
      %s110 = sphi 0, %s107
      %s111 = sphi 0, %s110
      %s127 = sphi 0, %s111
      %s131 = sphi 0, %s131
      %s133 = sphi 0, %s131
      %s134 = sphi 0, %s133
      %s148 = sphi 0, %s134
      %s152 = sphi 0, %s152
      %s154 = sphi 0, %s152
      %s155 = sphi 0, %s154
      %s169 = sphi 0, %s155
      %s173 = sphi 0, %s173
      %s175 = sphi 0, %s173
      %s176 = sphi 0, %s175
      %s190 = sphi 0, %s176
      %s194 = sphi 0, %s194
      %s196 = sphi 0, %s194
      %s197 = sphi 0, %s196
      %s211 = sphi 0, %s197
      %s215 = sphi 0, %s215
      %s217 = sphi 0, %s215
      %s218 = sphi 0, %s217
      %s232 = sphi 0, %s218
      %s236 = sphi 0, %s236
      %s238 = sphi 0, %s236
      %s239 = sphi 0, %s238
      %s253 = sphi 0, %s239
      %s259 = sphi 0, %s261
      %s262 = sphi 0, %s259
      %s263 = sphi 0, %s262
      %s279 = sphi 0, %s263
    $region4: #{llama_decoder_layer.1} parent=1 // loop_header_branch
      %22 = sbr.rel (%p20) target = $region8
    $region5: #{llama_decoder_layer.1} parent=1 // loop_body
      %s24 = ssub.s32 %s19, 1
      %s25 = ssub.s32 %s19, 2
      %s26 = sadd.s32 %s19, 1
      %s27 = ssub.s32 %s19, %s26
      %p28 = scmp.eq.s32.totalorder %s27, 0
      %s30 = sadd.s32 %s29, 1
      %s31 = scalar_select %p28, %s29, %s30
      %p34 = pneg %p28
      %p35 = scmp.eq.s32.totalorder %s19, 1
      %p36 = por %p34, %p35
      %p37 = scmp.ne.s32.totalorder %s29, %s32
      %p38 = scmp.eq.s32.totalorder %s19, 0
      %p39 = por %p37, %p38
      %p40 = scmp.ne.s32.totalorder %s29, %s32
      %p41 = scmp.eq.s32.totalorder %s24, 1
      %p42 = por %p40, %p41
      %p43 = scmp.ne.s32.totalorder %s32, %s33
      %p44 = scmp.eq.s32.totalorder %s24, 0
      %p45 = por %p43, %p44
      %p46 = scmp.ne.s32.totalorder %s32, %s33
      %p47 = scmp.eq.s32.totalorder %s25, 1
      %p48 = por %p46, %p47
      %p50 = scmp.ne.s32.totalorder %s33, %s49
      %p51 = scmp.eq.s32.totalorder %s25, 0
      %p52 = por %p50, %p51
      %s53 = ssub.s32 %s19, %s26
      %p54 = scmp.eq.s32.totalorder %s53, 0
      %s56 = sadd.s32 %s55, 1
      %s57 = scalar_select %p54, %s55, %s56
      %p60 = pneg %p54
      %p61 = scmp.eq.s32.totalorder %s19, 1
      %p62 = por %p60, %p61
      %p63 = scmp.ne.s32.totalorder %s55, %s58
      %p64 = scmp.eq.s32.totalorder %s19, 0
      %p65 = por %p63, %p64
      %p66 = scmp.ne.s32.totalorder %s55, %s58
      %p67 = scmp.eq.s32.totalorder %s24, 1
      %p68 = por %p66, %p67
      %p69 = scmp.ne.s32.totalorder %s58, %s59
      %p70 = scmp.eq.s32.totalorder %s24, 0
      %p71 = por %p69, %p70
      %p72 = scmp.ne.s32.totalorder %s58, %s59
      %p73 = scmp.eq.s32.totalorder %s25, 1
      %p74 = por %p72, %p73
      %p76 = scmp.ne.s32.totalorder %s59, %s75
      %p77 = scmp.eq.s32.totalorder %s25, 0
      %p78 = por %p76, %p77
      %s79 = ssub.s32 %s19, %s26
      %p80 = scmp.eq.s32.totalorder %s79, 0
      %s82 = sadd.s32 %s81, 1
      %s83 = scalar_select %p80, %s81, %s82
      %p86 = pneg %p80
      %p87 = scmp.eq.s32.totalorder %s19, 1
      %p88 = por %p86, %p87
      %p89 = scmp.ne.s32.totalorder %s81, %s84
      %p90 = scmp.eq.s32.totalorder %s19, 0
      %p91 = por %p89, %p90
      %p92 = scmp.ne.s32.totalorder %s81, %s84
      %p93 = scmp.eq.s32.totalorder %s24, 1
      %p94 = por %p92, %p93
      %p95 = scmp.ne.s32.totalorder %s84, %s85
      %p96 = scmp.eq.s32.totalorder %s24, 0
      %p97 = por %p95, %p96
      %p98 = scmp.ne.s32.totalorder %s84, %s85
      %p99 = scmp.eq.s32.totalorder %s25, 1
      %p100 = por %p98, %p99
      %p102 = scmp.ne.s32.totalorder %s85, %s101
      %p103 = scmp.eq.s32.totalorder %s25, 0
      %p104 = por %p102, %p103
      %s105 = ssub.s32 %s19, %s26
      %p106 = scmp.eq.s32.totalorder %s105, 0
      %s108 = sadd.s32 %s107, 1
      %s109 = scalar_select %p106, %s107, %s108
      %p112 = pneg %p106
      %p113 = scmp.eq.s32.totalorder %s19, 1
      %p114 = por %p112, %p113
      %p115 = scmp.ne.s32.totalorder %s107, %s110
      %p116 = scmp.eq.s32.totalorder %s19, 0
      %p117 = por %p115, %p116
      %p118 = scmp.ne.s32.totalorder %s107, %s110
      %p119 = scmp.eq.s32.totalorder %s24, 1
      %p120 = por %p118, %p119
      %p121 = scmp.ne.s32.totalorder %s110, %s111
      %p122 = scmp.eq.s32.totalorder %s24, 0
      %p123 = por %p121, %p122
      %p124 = scmp.ne.s32.totalorder %s110, %s111
      %p125 = scmp.eq.s32.totalorder %s25, 1
      %p126 = por %p124, %p125
      %p128 = scmp.ne.s32.totalorder %s111, %s127
      %p129 = scmp.eq.s32.totalorder %s25, 0
      %p130 = por %p128, %p129
      %s132 = sadd.s32 %s131, 1
      %p135 = scmp.eq.s32.totalorder %s19, 1
      %p136 = scmp.ne.s32.totalorder %s131, %s133
      %p137 = scmp.eq.s32.totalorder %s19, 0
      %p138 = por %p136, %p137
      %p139 = scmp.ne.s32.totalorder %s131, %s133
      %p140 = scmp.eq.s32.totalorder %s24, 1
      %p141 = por %p139, %p140
      %p142 = scmp.ne.s32.totalorder %s133, %s134
      %p143 = scmp.eq.s32.totalorder %s24, 0
      %p144 = por %p142, %p143
      %p145 = scmp.ne.s32.totalorder %s133, %s134
      %p146 = scmp.eq.s32.totalorder %s25, 1
      %p147 = por %p145, %p146
      %p149 = scmp.ne.s32.totalorder %s134, %s148
      %p150 = scmp.eq.s32.totalorder %s25, 0
      %p151 = por %p149, %p150
      %s153 = sadd.s32 %s152, 1
      %p156 = scmp.eq.s32.totalorder %s19, 1
      %p157 = scmp.ne.s32.totalorder %s152, %s154
      %p158 = scmp.eq.s32.totalorder %s19, 0
      %p159 = por %p157, %p158
      %p160 = scmp.ne.s32.totalorder %s152, %s154
      %p161 = scmp.eq.s32.totalorder %s24, 1
      %p162 = por %p160, %p161
      %p163 = scmp.ne.s32.totalorder %s154, %s155
      %p164 = scmp.eq.s32.totalorder %s24, 0
      %p165 = por %p163, %p164
      %p166 = scmp.ne.s32.totalorder %s154, %s155
      %p167 = scmp.eq.s32.totalorder %s25, 1
      %p168 = por %p166, %p167
      %p170 = scmp.ne.s32.totalorder %s155, %s169
      %p171 = scmp.eq.s32.totalorder %s25, 0
      %p172 = por %p170, %p171
      %s174 = sadd.s32 %s173, 1
      %p177 = scmp.eq.s32.totalorder %s19, 1
      %p178 = scmp.ne.s32.totalorder %s173, %s175
      %p179 = scmp.eq.s32.totalorder %s19, 0
      %p180 = por %p178, %p179
      %p181 = scmp.ne.s32.totalorder %s173, %s175
      %p182 = scmp.eq.s32.totalorder %s24, 1
      %p183 = por %p181, %p182
      %p184 = scmp.ne.s32.totalorder %s175, %s176
      %p185 = scmp.eq.s32.totalorder %s24, 0
      %p186 = por %p184, %p185
      %p187 = scmp.ne.s32.totalorder %s175, %s176
      %p188 = scmp.eq.s32.totalorder %s25, 1
      %p189 = por %p187, %p188
      %p191 = scmp.ne.s32.totalorder %s176, %s190
      %p192 = scmp.eq.s32.totalorder %s25, 0
      %p193 = por %p191, %p192
      %s195 = sadd.s32 %s194, 1
      %p198 = scmp.eq.s32.totalorder %s19, 1
      %p199 = scmp.ne.s32.totalorder %s194, %s196
      %p200 = scmp.eq.s32.totalorder %s19, 0
      %p201 = por %p199, %p200
      %p202 = scmp.ne.s32.totalorder %s194, %s196
      %p203 = scmp.eq.s32.totalorder %s24, 1
      %p204 = por %p202, %p203
      %p205 = scmp.ne.s32.totalorder %s196, %s197
      %p206 = scmp.eq.s32.totalorder %s24, 0
      %p207 = por %p205, %p206
      %p208 = scmp.ne.s32.totalorder %s196, %s197
      %p209 = scmp.eq.s32.totalorder %s25, 1
      %p210 = por %p208, %p209
      %p212 = scmp.ne.s32.totalorder %s197, %s211
      %p213 = scmp.eq.s32.totalorder %s25, 0
      %p214 = por %p212, %p213
      %s216 = sadd.s32 %s215, 1
      %p219 = scmp.eq.s32.totalorder %s19, 1
      %p220 = scmp.ne.s32.totalorder %s215, %s217
      %p221 = scmp.eq.s32.totalorder %s19, 0
      %p222 = por %p220, %p221
      %p223 = scmp.ne.s32.totalorder %s215, %s217
      %p224 = scmp.eq.s32.totalorder %s24, 1
      %p225 = por %p223, %p224
      %p226 = scmp.ne.s32.totalorder %s217, %s218
      %p227 = scmp.eq.s32.totalorder %s24, 0
      %p228 = por %p226, %p227
      %p229 = scmp.ne.s32.totalorder %s217, %s218
      %p230 = scmp.eq.s32.totalorder %s25, 1
      %p231 = por %p229, %p230
      %p233 = scmp.ne.s32.totalorder %s218, %s232
      %p234 = scmp.eq.s32.totalorder %s25, 0
      %p235 = por %p233, %p234
      %s237 = sadd.s32 %s236, 1
      %p240 = scmp.eq.s32.totalorder %s19, 1
      %p241 = scmp.ne.s32.totalorder %s236, %s238
      %p242 = scmp.eq.s32.totalorder %s19, 0
      %p243 = por %p241, %p242
      %p244 = scmp.ne.s32.totalorder %s236, %s238
      %p245 = scmp.eq.s32.totalorder %s24, 1
      %p246 = por %p244, %p245
      %p247 = scmp.ne.s32.totalorder %s238, %s239
      %p248 = scmp.eq.s32.totalorder %s24, 0
      %p249 = por %p247, %p248
      %p250 = scmp.ne.s32.totalorder %s238, %s239
      %p251 = scmp.eq.s32.totalorder %s25, 1
      %p252 = por %p250, %p251
      %p254 = scmp.ne.s32.totalorder %s239, %s253
      %p255 = scmp.eq.s32.totalorder %s25, 0
      %p256 = por %p254, %p255
      %s257 = ssub.s32 %s19, %s26
      %p258 = scmp.eq.s32.totalorder %s257, 0
      %s260 = sadd.s32 %s259, 1
      %s261 = scalar_select %p258, %s259, %s260
      %p264 = pneg %p258
      %p265 = scmp.eq.s32.totalorder %s19, 1
      %p266 = por %p264, %p265
      %p267 = scmp.ne.s32.totalorder %s259, %s262
      %p268 = scmp.eq.s32.totalorder %s19, 0
      %p269 = por %p267, %p268
      %p270 = scmp.ne.s32.totalorder %s259, %s262
      %p271 = scmp.eq.s32.totalorder %s24, 1
      %p272 = por %p270, %p271
      %p273 = scmp.ne.s32.totalorder %s262, %s263
      %p274 = scmp.eq.s32.totalorder %s24, 0
      %p275 = por %p273, %p274
      %p276 = scmp.ne.s32.totalorder %s262, %s263
      %p277 = scmp.eq.s32.totalorder %s25, 1
      %p278 = por %p276, %p277
      %p280 = scmp.ne.s32.totalorder %s263, %s279
      %p281 = scmp.eq.s32.totalorder %s25, 0
      %p282 = por %p280, %p281
      %p283 = scmp.le.s32.totalorder 1, %s19
      %p284 = scmp.lt.s32.totalorder %s19, 3
      %p285 = pnand %p283, %p284
      %p286 = pneg %p285
      // Predicated region
      $region9: #{llama_decoder_layer.1} parent=5 // pred_check
        _
      $region10: #{llama_decoder_layer.1} parent=5 // pred_check_branch
        %288 = sbr.rel (%p285) target = $region12
      $region11: #{llama_decoder_layer.1} parent=5 // pred_region
        %s289 = ssub.s32 %s19, 1
        // Predicated region
        $region13: #{llama_decoder_layer.1} parent=11 // pred_check
          %p290 = pneg %p144
        $region14: #{llama_decoder_layer.1} parent=11 // pred_check_branch
          %292 = sbr.rel (%p290) target = $region16
        $region15: #{llama_decoder_layer.1} parent=11 // pred_region
          _
        $region16: #{llama_decoder_layer.1} parent=11 // pred_fallthru
          _
        // Predicated region
        $region17: #{llama_decoder_layer.1} parent=11 // pred_check
          %p293 = pneg %p165
        $region18: #{llama_decoder_layer.1} parent=11 // pred_check_branch
          %295 = sbr.rel (%p293) target = $region20
        $region19: #{llama_decoder_layer.1} parent=11 // pred_region
          _
        $region20: #{llama_decoder_layer.1} parent=11 // pred_fallthru
          _
        // Predicated region
        $region21: #{llama_decoder_layer.1} parent=11 // pred_check
          %p296 = pneg %p186
        $region22: #{llama_decoder_layer.1} parent=11 // pred_check_branch
          %298 = sbr.rel (%p296) target = $region24
        $region23: #{llama_decoder_layer.1} parent=11 // pred_region
          _
        $region24: #{llama_decoder_layer.1} parent=11 // pred_fallthru
          _
        // Predicated region
        $region25: #{llama_decoder_layer.1} parent=11 // pred_check
          %p299 = pneg %p207
        $region26: #{llama_decoder_layer.1} parent=11 // pred_check_branch
          %301 = sbr.rel (%p299) target = $region28
        $region27: #{llama_decoder_layer.1} parent=11 // pred_region
          _
        $region28: #{llama_decoder_layer.1} parent=11 // pred_fallthru
          _
        // Predicated region
        $region29: #{llama_decoder_layer.1} parent=11 // pred_check
          %p302 = pneg %p228
        $region30: #{llama_decoder_layer.1} parent=11 // pred_check_branch
          %304 = sbr.rel (%p302) target = $region32
        $region31: #{llama_decoder_layer.1} parent=11 // pred_region
          _
        $region32: #{llama_decoder_layer.1} parent=11 // pred_fallthru
          _
        // Predicated region
        $region33: #{llama_decoder_layer.1} parent=11 // pred_check
          %p305 = pneg %p249
        $region34: #{llama_decoder_layer.1} parent=11 // pred_check_branch
          %307 = sbr.rel (%p305) target = $region36
        $region35: #{llama_decoder_layer.1} parent=11 // pred_region
          _
        $region36: #{llama_decoder_layer.1} parent=11 // pred_fallthru
          _
      $region12: #{llama_decoder_layer.1} parent=5 // pred_fallthru
        _
      %p308 = scmp.lt.s32.totalorder %s19, 2
      // Predicated region
      $region37: #{llama_decoder_layer.1} parent=5 // pred_check
        %p309 = pneg %p308
      $region38: #{llama_decoder_layer.1} parent=5 // pred_check_branch
        %311 = sbr.rel (%p309) target = $region40
      $region39: #{llama_decoder_layer.1} parent=5 // pred_region
        // Predicated region
        $region41: #{llama_decoder_layer.1} parent=39 // pred_check
          %p312 = pneg %p39
        $region42: #{llama_decoder_layer.1} parent=39 // pred_check_branch
          %314 = sbr.rel (%p312) target = $region44
        $region43: #{llama_decoder_layer.1} parent=39 // pred_region
          %p315 = scmp.lt.s32.totalorder %s19, 1
          %s316 = scalar_select %p315, %s19, 1
          %s317 = smul.addr %s316, 8
          %s318 = scalar_lea.vmem %s0, %s317
        $region44: #{llama_decoder_layer.1} parent=39 // pred_fallthru
          _
        // Predicated region
        $region45: #{llama_decoder_layer.1} parent=39 // pred_check
          %p319 = pneg %p65
        $region46: #{llama_decoder_layer.1} parent=39 // pred_check_branch
          %321 = sbr.rel (%p319) target = $region48
        $region47: #{llama_decoder_layer.1} parent=39 // pred_region
          %p322 = scmp.lt.s32.totalorder %s19, 1
          %s323 = scalar_select %p322, %s19, 1
          %s324 = smul.addr %s323, 8
          %s325 = scalar_lea.vmem %s1, %s324
        $region48: #{llama_decoder_layer.1} parent=39 // pred_fallthru
          _
        // Predicated region
        $region49: #{llama_decoder_layer.1} parent=39 // pred_check
          %p326 = pneg %p91
        $region50: #{llama_decoder_layer.1} parent=39 // pred_check_branch
          %328 = sbr.rel (%p326) target = $region52
        $region51: #{llama_decoder_layer.1} parent=39 // pred_region
          %p329 = scmp.lt.s32.totalorder %s19, 1
          %s330 = scalar_select %p329, %s19, 1
          %s331 = smul.addr %s330, 8
          %s332 = scalar_lea.vmem %s2, %s331
        $region52: #{llama_decoder_layer.1} parent=39 // pred_fallthru
          _
        // Predicated region
        $region53: #{llama_decoder_layer.1} parent=39 // pred_check
          %p333 = pneg %p117
        $region54: #{llama_decoder_layer.1} parent=39 // pred_check_branch
          %335 = sbr.rel (%p333) target = $region56
        $region55: #{llama_decoder_layer.1} parent=39 // pred_region
          %p336 = scmp.lt.s32.totalorder %s19, 1
          %s337 = scalar_select %p336, %s19, 1
          %s338 = smul.addr %s337, 8
          %s339 = scalar_lea.vmem %s3, %s338
        $region56: #{llama_decoder_layer.1} parent=39 // pred_fallthru
          _
      $region40: #{llama_decoder_layer.1} parent=5 // pred_fallthru
        _
      %p340 = scmp.le.s32.totalorder 1, %s19
      %p341 = scmp.lt.s32.totalorder %s19, 3
      %p342 = pnand %p340, %p341
      %p343 = pneg %p342
      // Predicated region
      $region57: #{llama_decoder_layer.1} parent=5 // pred_check
        _
      $region58: #{llama_decoder_layer.1} parent=5 // pred_check_branch
        %345 = sbr.rel (%p342) target = $region60
      $region59: #{llama_decoder_layer.1} parent=5 // pred_region
        %s346 = ssub.s32 %s19, 1
        %p347 = scmp.lt.s32.totalorder %s24, 1
        %s348 = scalar_select %p347, %s24, 1
        %s349 = smul.addr %s348, 8
        %s350 = scalar_lea.vmem %s0, %s349
        %p351 = pneg %p45
        %p352 = pneg %p42
        %p353 = scmp.lt.s32.totalorder %s24, 1
        %s354 = scalar_select %p353, %s24, 1
        %s355 = smul.addr %s354, 8
        %s356 = scalar_lea.vmem %s1, %s355
        %p357 = pneg %p71
        %p358 = pneg %p68
        %p359 = scmp.lt.s32.totalorder %s24, 1
        %s360 = scalar_select %p359, %s24, 1
        %s361 = smul.addr %s360, 8
        %s362 = scalar_lea.vmem %s2, %s361
        %p363 = pneg %p97
        %p364 = pneg %p94
        %p365 = scmp.lt.s32.totalorder %s24, 1
        %s366 = scalar_select %p365, %s24, 1
        %s367 = smul.addr %s366, 8
        %s368 = scalar_lea.vmem %s3, %s367
        %p369 = pneg %p123
        %p370 = pneg %p120
        %p371 = pneg %p144
        %p372 = pneg %p141
        %p373 = pneg %p165
        %p374 = pneg %p162
        %p375 = pneg %p186
        %p376 = pneg %p183
        %p377 = pneg %p207
        %p378 = pneg %p204
        %p379 = pneg %p228
        %p380 = pneg %p225
        %p381 = pneg %p249
        %p382 = pneg %p246
        %p383 = pneg %p275
        %p384 = pneg %p272
        %s385 = sand.u32 %s262, 1
        %s386 = scalar_lea.sflag [#allocation3], %s385
        %s387 = sand.u32 %s262, 1
        %s388 = smul.addr %s387, 8
        %s389 = scalar_lea.vmem [#allocation2], %s388
        %p390 = scmp.lt.s32.totalorder %s24, 1
        %s391 = scalar_select %p390, %s24, 1
        %s392 = smul.addr %s391, 8
        %s393 = scalar_lea.vmem %s0, %s392
        %p394 = scmp.lt.s32.totalorder %s24, 1
        %s395 = scalar_select %p394, %s24, 1
        %s396 = smul.addr %s395, 8
        %s397 = scalar_lea.vmem %s1, %s396
        %p398 = scmp.lt.s32.totalorder %s24, 1
        %s399 = scalar_select %p398, %s24, 1
        %s400 = smul.addr %s399, 8
        %s401 = scalar_lea.vmem %s2, %s400
        %p402 = scmp.lt.s32.totalorder %s24, 1
        %s403 = scalar_select %p402, %s24, 1
        %s404 = smul.addr %s403, 8
        %s405 = scalar_lea.vmem %s3, %s404
        %v407 = vld [vmem:[%s393] sm:$0xff]
        %v408 = vld [vmem:[%s397] sm:$0xff]
        %v409 = vld [vmem:[%s401] sm:$0xff]
        %v410 = vld [vmem:[%s405] sm:$0xff]
        %v411 = vld [vmem:[%s8] sm:$0x1]
        %v412 = vmul.f32 %v407, %v407
        %413 = vadd.xlane.f32.xlu0 %v412
        %v414 = vpop.xlane.xlu0 %413
        %v415 = vrcp.pop 128.0
        %v416 = vmul.f32 %v414, %v415
        %v417 = vadd.f32 %v416, 1e-06
        %v418 = vrsqrt.pop %v417
        %v419 = vmul.f32 %v407, %v418
        %v421 = vlaneseq
        %v422 = vshrl.u32 %v421, 7
        %v423 = vsub.s32 0, %v422
        %v424 = vrot.slane %v411, %v423
        %v426 = vmul.f32 %v419, %v424
        %v427 = vpack.c.bf16 %v426, %v426
        %v428 = vld [vmem:[%s4] sm:$0xff]
        %v429 = vld [vmem:[%s4 + $0x8] sm:$0xff]
        %v430 = vld [vmem:[%s4 + $0x10] sm:$0xff]
        %v431 = vld [vmem:[%s4 + $0x18] sm:$0xff]
        %v432 = vld [vmem:[%s4 + $0x20] sm:$0xff]
        %v433 = vld [vmem:[%s4 + $0x28] sm:$0xff]
        %v434 = vld [vmem:[%s4 + $0x30] sm:$0xff]
        %v435 = vld [vmem:[%s4 + $0x38] sm:$0xff]
        %v436 = vld [vmem:[%s4 + $0x40] sm:$0xff]
        %v437 = vld [vmem:[%s4 + $0x48] sm:$0xff]
        %v438 = vld [vmem:[%s4 + $0x50] sm:$0xff]
        %v439 = vld [vmem:[%s4 + $0x58] sm:$0xff]
        %v440 = vld [vmem:[%s4 + $0x60] sm:$0xff]
        %v441 = vld [vmem:[%s4 + $0x68] sm:$0xff]
        %v442 = vld [vmem:[%s4 + $0x70] sm:$0xff]
        %v443 = vld [vmem:[%s4 + $0x78] sm:$0xff]
        %v444 = vld [vmem:[%s4 + $0x80] sm:$0xff]
        %v445 = vld [vmem:[%s4 + $0x88] sm:$0xff]
        %v446 = vld [vmem:[%s4 + $0x90] sm:$0xff]
        %v447 = vld [vmem:[%s4 + $0x98] sm:$0xff]
        %v448 = vld [vmem:[%s4 + $0xa0] sm:$0xff]
        %v449 = vld [vmem:[%s4 + $0xa8] sm:$0xff]
        %v450 = vld [vmem:[%s4 + $0xb0] sm:$0xff]
        %v451 = vld [vmem:[%s4 + $0xb8] sm:$0xff]
        %v452 = vld [vmem:[%s4 + $0xc0] sm:$0xff]
        %v453 = vld [vmem:[%s4 + $0xc8] sm:$0xff]
        %v454 = vld [vmem:[%s4 + $0xd0] sm:$0xff]
        %v455 = vld [vmem:[%s4 + $0xd8] sm:$0xff]
        %v456 = vld [vmem:[%s4 + $0xe0] sm:$0xff]
        %v457 = vld [vmem:[%s4 + $0xe8] sm:$0xff]
        %v458 = vld [vmem:[%s4 + $0xf0] sm:$0xff]
        %v459 = vld [vmem:[%s4 + $0xf8] sm:$0xff]
        %v460 = vld [vmem:[%s4 + $0x100] sm:$0xff]
        %v461 = vld [vmem:[%s4 + $0x108] sm:$0xff]
        %v462 = vld [vmem:[%s4 + $0x110] sm:$0xff]
        %v463 = vld [vmem:[%s4 + $0x118] sm:$0xff]
        %v464 = vld [vmem:[%s4 + $0x120] sm:$0xff]
        %v465 = vld [vmem:[%s4 + $0x128] sm:$0xff]
        %v466 = vld [vmem:[%s4 + $0x130] sm:$0xff]
        %v467 = vld [vmem:[%s4 + $0x138] sm:$0xff]
        %v468 = vld [vmem:[%s4 + $0x140] sm:$0xff]
        %v469 = vld [vmem:[%s4 + $0x148] sm:$0xff]
        %v470 = vld [vmem:[%s4 + $0x150] sm:$0xff]
        %v471 = vld [vmem:[%s4 + $0x158] sm:$0xff]
        %v472 = vld [vmem:[%s4 + $0x160] sm:$0xff]
        %v473 = vld [vmem:[%s4 + $0x168] sm:$0xff]
        %v474 = vld [vmem:[%s4 + $0x170] sm:$0xff]
        %v475 = vld [vmem:[%s4 + $0x178] sm:$0xff]
        %v476 = vld [vmem:[%s4 + $0x180] sm:$0xff]
        %v477 = vld [vmem:[%s4 + $0x188] sm:$0xff]
        %v478 = vld [vmem:[%s4 + $0x190] sm:$0xff]
        %v479 = vld [vmem:[%s4 + $0x198] sm:$0xff]
        %v480 = vld [vmem:[%s4 + $0x1a0] sm:$0xff]
        %v481 = vld [vmem:[%s4 + $0x1a8] sm:$0xff]
        %v482 = vld [vmem:[%s4 + $0x1b0] sm:$0xff]
        %v483 = vld [vmem:[%s4 + $0x1b8] sm:$0xff]
        %v484 = vld [vmem:[%s4 + $0x1c0] sm:$0xff]
        %v485 = vld [vmem:[%s4 + $0x1c8] sm:$0xff]
        %v486 = vld [vmem:[%s4 + $0x1d0] sm:$0xff]
        %v487 = vld [vmem:[%s4 + $0x1d8] sm:$0xff]
        %v488 = vld [vmem:[%s4 + $0x1e0] sm:$0xff]
        %v489 = vld [vmem:[%s4 + $0x1e8] sm:$0xff]
        %v490 = vld [vmem:[%s4 + $0x1f0] sm:$0xff]
        %v491 = vld [vmem:[%s4 + $0x1f8] sm:$0xff]
        %v508 = vunpack.c.l.b16 %v428
        %v509 = vunpack.c.h.b16 %v428
        %v510 = vunpack.c.l.b16 %v429
        %v511 = vunpack.c.h.b16 %v429
        %v512 = vunpack.c.l.b16 %v430
        %v513 = vunpack.c.h.b16 %v430
        %v514 = vunpack.c.l.b16 %v431
        %v515 = vunpack.c.h.b16 %v431
        %v516 = vunpack.c.l.b16 %v432
        %v517 = vunpack.c.h.b16 %v432
        %v518 = vunpack.c.l.b16 %v433
        %v519 = vunpack.c.h.b16 %v433
        %v520 = vunpack.c.l.b16 %v434
        %v521 = vunpack.c.h.b16 %v434
        %v522 = vunpack.c.l.b16 %v435
        %v523 = vunpack.c.h.b16 %v435
        %v524 = vunpack.c.l.b16 %v436
        %v525 = vunpack.c.h.b16 %v436
        %v526 = vunpack.c.l.b16 %v437
        %v527 = vunpack.c.h.b16 %v437
        %v528 = vunpack.c.l.b16 %v438
        %v529 = vunpack.c.h.b16 %v438
        %v530 = vunpack.c.l.b16 %v439
        %v531 = vunpack.c.h.b16 %v439
        %v532 = vunpack.c.l.b16 %v440
        %v533 = vunpack.c.h.b16 %v440
        %v534 = vunpack.c.l.b16 %v441
        %v535 = vunpack.c.h.b16 %v441
        %v536 = vunpack.c.l.b16 %v442
        %v537 = vunpack.c.h.b16 %v442
        %v538 = vunpack.c.l.b16 %v443
        %v539 = vunpack.c.h.b16 %v443
        %v540 = vpack.c.b16 %v510, %v508
        %v541 = vpack.c.b16 %v511, %v509
        %v542 = vpack.c.b16 %v514, %v512
        %v543 = vpack.c.b16 %v515, %v513
        %v544 = vpack.c.b16 %v518, %v516
        %v545 = vpack.c.b16 %v519, %v517
        %v546 = vpack.c.b16 %v522, %v520
        %v547 = vpack.c.b16 %v523, %v521
        %v548 = vpack.c.b16 %v526, %v524
        %v549 = vpack.c.b16 %v527, %v525
        %v550 = vpack.c.b16 %v530, %v528
        %v551 = vpack.c.b16 %v531, %v529
        %v552 = vpack.c.b16 %v534, %v532
        %v553 = vpack.c.b16 %v535, %v533
        %v554 = vpack.c.b16 %v538, %v536
        %v555 = vpack.c.b16 %v539, %v537
        %572 = vmatprep.subr.bf16.mxu0 %v555
        %573 = vmatpush1.bf16.msra.mxu0 %v554
        %574 = vmatprep.subr.bf16.mxu0 %v553
        %575 = vmatpush1.bf16.msra.mxu0 %v552
        %576 = vmatprep.subr.bf16.mxu0 %v551
        %577 = vmatpush1.bf16.msra.mxu0 %v550
        %578 = vmatprep.subr.bf16.mxu0 %v549
        %579 = vmatpush1.bf16.msra.mxu0 %v548
        %580 = vmatprep.subr.bf16.mxu0 %v547
        %581 = vmatpush1.bf16.msra.mxu0 %v546
        %582 = vmatprep.subr.bf16.mxu0 %v545
        %583 = vmatpush1.bf16.msra.mxu0 %v544
        %584 = vmatprep.subr.bf16.mxu0 %v543
        %585 = vmatpush1.bf16.msra.mxu0 %v542
        %586 = vmatprep.subr.bf16.mxu0 %v541
        %587 = vmatpush1.bf16.msra.mxu0 %v540
        %588 = vmatprep.subr.bf16.mxu0 0
        %589 = vmatpush2.bf16.msra.mxu0 0
        %590 = vmatprep.subr.bf16.mxu0 0
        %591 = vmatpush2.bf16.msra.mxu0 0
        %592 = vmatprep.subr.bf16.mxu0 0
        %593 = vmatpush2.bf16.msra.mxu0 0
        %594 = vmatprep.subr.bf16.mxu0 0
        %595 = vmatpush2.bf16.msra.mxu0 0
        %596 = vmatprep.subr.bf16.mxu0 0
        %597 = vmatpush2.bf16.msra.mxu0 0
        %598 = vmatprep.subr.bf16.mxu0 0
        %599 = vmatpush2.bf16.msra.mxu0 0
        %600 = vmatprep.subr.bf16.mxu0 0
        %601 = vmatpush2.bf16.msra.mxu0 0
        %602 = vmatprep.subr.bf16.mxu0 0
        %603 = vmatpush2.bf16.msra.mxu0 0
        %604 = vmatprep.mubr.bf16.mxu0 0
        %605 = vmatmul.mubr.bf16.gmra.mxu0 %v427
        %v606 = vpop.f32.mrf.mxu0
        %v607 = vadd.f32 0.0, %v606
        %v608 = vpop.f32.mrf.mxu0
        %v609 = vadd.f32 0.0, %v608
        %v610 = vpop.f32.mrf.mxu0
        %v611 = vpop.f32.mrf.mxu0
        %612 = vdwg.mxu0
        %v629 = vunpack.c.l.b16 %v444
        %v630 = vunpack.c.h.b16 %v444
        %v631 = vunpack.c.l.b16 %v445
        %v632 = vunpack.c.h.b16 %v445
        %v633 = vunpack.c.l.b16 %v446
        %v634 = vunpack.c.h.b16 %v446
        %v635 = vunpack.c.l.b16 %v447
        %v636 = vunpack.c.h.b16 %v447
        %v637 = vunpack.c.l.b16 %v448
        %v638 = vunpack.c.h.b16 %v448
        %v639 = vunpack.c.l.b16 %v449
        %v640 = vunpack.c.h.b16 %v449
        %v641 = vunpack.c.l.b16 %v450
        %v642 = vunpack.c.h.b16 %v450
        %v643 = vunpack.c.l.b16 %v451
        %v644 = vunpack.c.h.b16 %v451
        %v645 = vunpack.c.l.b16 %v452
        %v646 = vunpack.c.h.b16 %v452
        %v647 = vunpack.c.l.b16 %v453
        %v648 = vunpack.c.h.b16 %v453
        %v649 = vunpack.c.l.b16 %v454
        %v650 = vunpack.c.h.b16 %v454
        %v651 = vunpack.c.l.b16 %v455
        %v652 = vunpack.c.h.b16 %v455
        %v653 = vunpack.c.l.b16 %v456
        %v654 = vunpack.c.h.b16 %v456
        %v655 = vunpack.c.l.b16 %v457
        %v656 = vunpack.c.h.b16 %v457
        %v657 = vunpack.c.l.b16 %v458
        %v658 = vunpack.c.h.b16 %v458
        %v659 = vunpack.c.l.b16 %v459
        %v660 = vunpack.c.h.b16 %v459
        %v661 = vpack.c.b16 %v631, %v629
        %v662 = vpack.c.b16 %v632, %v630
        %v663 = vpack.c.b16 %v635, %v633
        %v664 = vpack.c.b16 %v636, %v634
        %v665 = vpack.c.b16 %v639, %v637
        %v666 = vpack.c.b16 %v640, %v638
        %v667 = vpack.c.b16 %v643, %v641
        %v668 = vpack.c.b16 %v644, %v642
        %v669 = vpack.c.b16 %v647, %v645
        %v670 = vpack.c.b16 %v648, %v646
        %v671 = vpack.c.b16 %v651, %v649
        %v672 = vpack.c.b16 %v652, %v650
        %v673 = vpack.c.b16 %v655, %v653
        %v674 = vpack.c.b16 %v656, %v654
        %v675 = vpack.c.b16 %v659, %v657
        %v676 = vpack.c.b16 %v660, %v658
        %693 = vmatprep.subr.bf16.mxu0 %v676
        %694 = vmatpush1.bf16.msra.mxu0 %v675
        %695 = vmatprep.subr.bf16.mxu0 %v674
        %696 = vmatpush1.bf16.msra.mxu0 %v673
        %697 = vmatprep.subr.bf16.mxu0 %v672
        %698 = vmatpush1.bf16.msra.mxu0 %v671
        %699 = vmatprep.subr.bf16.mxu0 %v670
        %700 = vmatpush1.bf16.msra.mxu0 %v669
        %701 = vmatprep.subr.bf16.mxu0 %v668
        %702 = vmatpush1.bf16.msra.mxu0 %v667
        %703 = vmatprep.subr.bf16.mxu0 %v666
        %704 = vmatpush1.bf16.msra.mxu0 %v665
        %705 = vmatprep.subr.bf16.mxu0 %v664
        %706 = vmatpush1.bf16.msra.mxu0 %v663
        %707 = vmatprep.subr.bf16.mxu0 %v662
        %708 = vmatpush1.bf16.msra.mxu0 %v661
        %709 = vmatprep.subr.bf16.mxu0 0
        %710 = vmatpush2.bf16.msra.mxu0 0
        %711 = vmatprep.subr.bf16.mxu0 0
        %712 = vmatpush2.bf16.msra.mxu0 0
        %713 = vmatprep.subr.bf16.mxu0 0
        %714 = vmatpush2.bf16.msra.mxu0 0
        %715 = vmatprep.subr.bf16.mxu0 0
        %716 = vmatpush2.bf16.msra.mxu0 0
        %717 = vmatprep.subr.bf16.mxu0 0
        %718 = vmatpush2.bf16.msra.mxu0 0
        %719 = vmatprep.subr.bf16.mxu0 0
        %720 = vmatpush2.bf16.msra.mxu0 0
        %721 = vmatprep.subr.bf16.mxu0 0
        %722 = vmatpush2.bf16.msra.mxu0 0
        %723 = vmatprep.subr.bf16.mxu0 0
        %724 = vmatpush2.bf16.msra.mxu0 0
        %725 = vmatprep.mubr.bf16.mxu0 0
        %726 = vmatmul.mubr.bf16.gmra.mxu0 %v427
        %v727 = vpop.f32.mrf.mxu0
        %v728 = vadd.f32 0.0, %v727
        %v729 = vpop.f32.mrf.mxu0
        %v730 = vadd.f32 0.0, %v729
        %v731 = vpop.f32.mrf.mxu0
        %v732 = vpop.f32.mrf.mxu0
        %733 = vdwg.mxu0
        %v750 = vunpack.c.l.b16 %v460
        %v751 = vunpack.c.h.b16 %v460
        %v752 = vunpack.c.l.b16 %v461
        %v753 = vunpack.c.h.b16 %v461
        %v754 = vunpack.c.l.b16 %v462
        %v755 = vunpack.c.h.b16 %v462
        %v756 = vunpack.c.l.b16 %v463
        %v757 = vunpack.c.h.b16 %v463
        %v758 = vunpack.c.l.b16 %v464
        %v759 = vunpack.c.h.b16 %v464
        %v760 = vunpack.c.l.b16 %v465
        %v761 = vunpack.c.h.b16 %v465
        %v762 = vunpack.c.l.b16 %v466
        %v763 = vunpack.c.h.b16 %v466
        %v764 = vunpack.c.l.b16 %v467
        %v765 = vunpack.c.h.b16 %v467
        %v766 = vunpack.c.l.b16 %v468
        %v767 = vunpack.c.h.b16 %v468
        %v768 = vunpack.c.l.b16 %v469
        %v769 = vunpack.c.h.b16 %v469
        %v770 = vunpack.c.l.b16 %v470
        %v771 = vunpack.c.h.b16 %v470
        %v772 = vunpack.c.l.b16 %v471
        %v773 = vunpack.c.h.b16 %v471
        %v774 = vunpack.c.l.b16 %v472
        %v775 = vunpack.c.h.b16 %v472
        %v776 = vunpack.c.l.b16 %v473
        %v777 = vunpack.c.h.b16 %v473
        %v778 = vunpack.c.l.b16 %v474
        %v779 = vunpack.c.h.b16 %v474
        %v780 = vunpack.c.l.b16 %v475
        %v781 = vunpack.c.h.b16 %v475
        %v782 = vpack.c.b16 %v752, %v750
        %v783 = vpack.c.b16 %v753, %v751
        %v784 = vpack.c.b16 %v756, %v754
        %v785 = vpack.c.b16 %v757, %v755
        %v786 = vpack.c.b16 %v760, %v758
        %v787 = vpack.c.b16 %v761, %v759
        %v788 = vpack.c.b16 %v764, %v762
        %v789 = vpack.c.b16 %v765, %v763
        %v790 = vpack.c.b16 %v768, %v766
        %v791 = vpack.c.b16 %v769, %v767
        %v792 = vpack.c.b16 %v772, %v770
        %v793 = vpack.c.b16 %v773, %v771
        %v794 = vpack.c.b16 %v776, %v774
        %v795 = vpack.c.b16 %v777, %v775
        %v796 = vpack.c.b16 %v780, %v778
        %v797 = vpack.c.b16 %v781, %v779
        %814 = vmatprep.subr.bf16.mxu0 %v797
        %815 = vmatpush1.bf16.msra.mxu0 %v796
        %816 = vmatprep.subr.bf16.mxu0 %v795
        %817 = vmatpush1.bf16.msra.mxu0 %v794
        %818 = vmatprep.subr.bf16.mxu0 %v793
        %819 = vmatpush1.bf16.msra.mxu0 %v792
        %820 = vmatprep.subr.bf16.mxu0 %v791
        %821 = vmatpush1.bf16.msra.mxu0 %v790
        %822 = vmatprep.subr.bf16.mxu0 %v789
        %823 = vmatpush1.bf16.msra.mxu0 %v788
        %824 = vmatprep.subr.bf16.mxu0 %v787
        %825 = vmatpush1.bf16.msra.mxu0 %v786
        %826 = vmatprep.subr.bf16.mxu0 %v785
        %827 = vmatpush1.bf16.msra.mxu0 %v784
        %828 = vmatprep.subr.bf16.mxu0 %v783
        %829 = vmatpush1.bf16.msra.mxu0 %v782
        %830 = vmatprep.subr.bf16.mxu0 0
        %831 = vmatpush2.bf16.msra.mxu0 0
        %832 = vmatprep.subr.bf16.mxu0 0
        %833 = vmatpush2.bf16.msra.mxu0 0
        %834 = vmatprep.subr.bf16.mxu0 0
        %835 = vmatpush2.bf16.msra.mxu0 0
        %836 = vmatprep.subr.bf16.mxu0 0
        %837 = vmatpush2.bf16.msra.mxu0 0
        %838 = vmatprep.subr.bf16.mxu0 0
        %839 = vmatpush2.bf16.msra.mxu0 0
        %840 = vmatprep.subr.bf16.mxu0 0
        %841 = vmatpush2.bf16.msra.mxu0 0
        %842 = vmatprep.subr.bf16.mxu0 0
        %843 = vmatpush2.bf16.msra.mxu0 0
        %844 = vmatprep.subr.bf16.mxu0 0
        %845 = vmatpush2.bf16.msra.mxu0 0
        %846 = vmatprep.mubr.bf16.mxu0 0
        %847 = vmatmul.mubr.bf16.gmra.mxu0 %v427
        %v848 = vpop.f32.mrf.mxu0
        %v849 = vadd.f32 0.0, %v848
        %v850 = vpop.f32.mrf.mxu0
        %v851 = vadd.f32 0.0, %v850
        %v852 = vpop.f32.mrf.mxu0
        %v853 = vpop.f32.mrf.mxu0
        %854 = vdwg.mxu0
        %v871 = vunpack.c.l.b16 %v476
        %v872 = vunpack.c.h.b16 %v476
        %v873 = vunpack.c.l.b16 %v477
        %v874 = vunpack.c.h.b16 %v477
        %v875 = vunpack.c.l.b16 %v478
        %v876 = vunpack.c.h.b16 %v478
        %v877 = vunpack.c.l.b16 %v479
        %v878 = vunpack.c.h.b16 %v479
        %v879 = vunpack.c.l.b16 %v480
        %v880 = vunpack.c.h.b16 %v480
        %v881 = vunpack.c.l.b16 %v481
        %v882 = vunpack.c.h.b16 %v481
        %v883 = vunpack.c.l.b16 %v482
        %v884 = vunpack.c.h.b16 %v482
        %v885 = vunpack.c.l.b16 %v483
        %v886 = vunpack.c.h.b16 %v483
        %v887 = vunpack.c.l.b16 %v484
        %v888 = vunpack.c.h.b16 %v484
        %v889 = vunpack.c.l.b16 %v485
        %v890 = vunpack.c.h.b16 %v485
        %v891 = vunpack.c.l.b16 %v486
        %v892 = vunpack.c.h.b16 %v486
        %v893 = vunpack.c.l.b16 %v487
        %v894 = vunpack.c.h.b16 %v487
        %v895 = vunpack.c.l.b16 %v488
        %v896 = vunpack.c.h.b16 %v488
        %v897 = vunpack.c.l.b16 %v489
        %v898 = vunpack.c.h.b16 %v489
        %v899 = vunpack.c.l.b16 %v490
        %v900 = vunpack.c.h.b16 %v490
        %v901 = vunpack.c.l.b16 %v491
        %v902 = vunpack.c.h.b16 %v491
        %v903 = vpack.c.b16 %v873, %v871
        %v904 = vpack.c.b16 %v874, %v872
        %v905 = vpack.c.b16 %v877, %v875
        %v906 = vpack.c.b16 %v878, %v876
        %v907 = vpack.c.b16 %v881, %v879
        %v908 = vpack.c.b16 %v882, %v880
        %v909 = vpack.c.b16 %v885, %v883
        %v910 = vpack.c.b16 %v886, %v884
        %v911 = vpack.c.b16 %v889, %v887
        %v912 = vpack.c.b16 %v890, %v888
        %v913 = vpack.c.b16 %v893, %v891
        %v914 = vpack.c.b16 %v894, %v892
        %v915 = vpack.c.b16 %v897, %v895
        %v916 = vpack.c.b16 %v898, %v896
        %v917 = vpack.c.b16 %v901, %v899
        %v918 = vpack.c.b16 %v902, %v900
        %935 = vmatprep.subr.bf16.mxu0 %v918
        %936 = vmatpush1.bf16.msra.mxu0 %v917
        %937 = vmatprep.subr.bf16.mxu0 %v916
        %938 = vmatpush1.bf16.msra.mxu0 %v915
        %939 = vmatprep.subr.bf16.mxu0 %v914
        %940 = vmatpush1.bf16.msra.mxu0 %v913
        %941 = vmatprep.subr.bf16.mxu0 %v912
        %942 = vmatpush1.bf16.msra.mxu0 %v911
        %943 = vmatprep.subr.bf16.mxu0 %v910
        %944 = vmatpush1.bf16.msra.mxu0 %v909
        %945 = vmatprep.subr.bf16.mxu0 %v908
        %946 = vmatpush1.bf16.msra.mxu0 %v907
        %947 = vmatprep.subr.bf16.mxu0 %v906
        %948 = vmatpush1.bf16.msra.mxu0 %v905
        %949 = vmatprep.subr.bf16.mxu0 %v904
        %950 = vmatpush1.bf16.msra.mxu0 %v903
        %951 = vmatprep.subr.bf16.mxu0 0
        %952 = vmatpush2.bf16.msra.mxu0 0
        %953 = vmatprep.subr.bf16.mxu0 0
        %954 = vmatpush2.bf16.msra.mxu0 0
        %955 = vmatprep.subr.bf16.mxu0 0
        %956 = vmatpush2.bf16.msra.mxu0 0
        %957 = vmatprep.subr.bf16.mxu0 0
        %958 = vmatpush2.bf16.msra.mxu0 0
        %959 = vmatprep.subr.bf16.mxu0 0
        %960 = vmatpush2.bf16.msra.mxu0 0
        %961 = vmatprep.subr.bf16.mxu0 0
        %962 = vmatpush2.bf16.msra.mxu0 0
        %963 = vmatprep.subr.bf16.mxu0 0
        %964 = vmatpush2.bf16.msra.mxu0 0
        %965 = vmatprep.subr.bf16.mxu0 0
        %966 = vmatpush2.bf16.msra.mxu0 0
        %967 = vmatprep.mubr.bf16.mxu0 0
        %968 = vmatmul.mubr.bf16.gmra.mxu0 %v427
        %v969 = vpop.f32.mrf.mxu0
        %v970 = vadd.f32 0.0, %v969
        %v971 = vpop.f32.mrf.mxu0
        %v972 = vadd.f32 0.0, %v971
        %v973 = vpop.f32.mrf.mxu0
        %v974 = vpop.f32.mrf.mxu0
        %975 = vdwg.mxu0
        %v976 = vmul.f32 %v607, %v409
        %v977 = vmul.f32 %v728, %v409
        %v978 = vmul.f32 %v849, %v409
        %v979 = vmul.f32 %v970, %v409
        %981 = vrot.lane.b32.xlu0 %v410, 32
        %v982 = vpop.permute.xlu0 %981
        %v984 = vmul.f32 %v607, %v982
        %v985 = vmul.f32 %v728, %v982
        %v986 = vmul.f32 %v849, %v982
        %v987 = vmul.f32 %v970, %v982
        %992 = vrot.lane.b32.xlu0 %v984, 96
        %v993 = vpop.permute.xlu0 %992
        %994 = vrot.lane.b32.xlu0 %v985, 96
        %v995 = vpop.permute.xlu0 %994
        %996 = vrot.lane.b32.xlu0 %v986, 96
        %v997 = vpop.permute.xlu0 %996
        %998 = vrot.lane.b32.xlu0 %v987, 96
        %v999 = vpop.permute.xlu0 %998
        %v1004 = vadd.f32 %v976, %v993
        %v1005 = vadd.f32 %v977, %v995
        %v1006 = vadd.f32 %v978, %v997
        %v1007 = vadd.f32 %v979, %v999
        %1009 = vrot.lane.b32.xlu0 %v409, 64
        %v1010 = vpop.permute.xlu0 %1009
        %v1012 = vmul.f32 %v607, %v1010
        %v1013 = vmul.f32 %v728, %v1010
        %v1014 = vmul.f32 %v849, %v1010
        %v1015 = vmul.f32 %v970, %v1010
        %1016 = vrot.lane.b32.xlu0 %v410, 96
        %v1017 = vpop.permute.xlu0 %1016
        %v1019 = vmul.f32 %v607, %v1017
        %v1020 = vmul.f32 %v728, %v1017
        %v1021 = vmul.f32 %v849, %v1017
        %v1022 = vmul.f32 %v970, %v1017
        %1027 = vrot.lane.b32.xlu0 %v1019, 96
        %v1028 = vpop.permute.xlu0 %1027
        %1029 = vrot.lane.b32.xlu0 %v1020, 96
        %v1030 = vpop.permute.xlu0 %1029
        %1031 = vrot.lane.b32.xlu0 %v1021, 96
        %v1032 = vpop.permute.xlu0 %1031
        %1033 = vrot.lane.b32.xlu0 %v1022, 96
        %v1034 = vpop.permute.xlu0 %1033
        %v1039 = vadd.f32 %v1012, %v1028
        %v1040 = vadd.f32 %v1013, %v1030
        %v1041 = vadd.f32 %v1014, %v1032
        %v1042 = vadd.f32 %v1015, %v1034
        %v1043 = vpack.c.bf16 %v1004, %v1004
        %v1044 = vpack.c.bf16 %v1005, %v1005
        %v1045 = vpack.c.bf16 %v1006, %v1006
        %v1046 = vpack.c.bf16 %v1007, %v1007
        %v1047 = vpack.c.bf16 %v1039, %v1039
        %v1048 = vpack.c.bf16 %v1040, %v1040
        %v1049 = vpack.c.bf16 %v1041, %v1041
        %v1050 = vpack.c.bf16 %v1042, %v1042
        %1052 = vrot.lane.b32.xlu0 %v1047, 64
        %v1053 = vpop.permute.xlu0 %1052
        %vm1054 = vcmask 261120
        %v1056 = vsel %vm1054, %v1043, 0
        %v1059 = vsel %vm1054, %v1053, 0
        %1061 = vmatprep.subr.bf16.mxu0 0
        %1062 = vmatpush1.bf16.xpose.msra.mxu0 0
        %1063 = vmatprep.subr.bf16.mxu0 0
        %1064 = vmatpush1.bf16.xpose.msra.mxu0 0
        %1065 = vmatprep.subr.bf16.mxu0 0
        %1066 = vmatpush1.bf16.xpose.msra.mxu0 0
        %1067 = vmatprep.subr.bf16.mxu0 0
        %1068 = vmatpush1.bf16.xpose.msra.mxu0 0
        %1069 = vmatprep.subr.bf16.mxu0 0
        %1070 = vmatpush1.bf16.xpose.msra.mxu0 0
        %1071 = vmatprep.subr.bf16.mxu0 0
        %1072 = vmatpush1.bf16.xpose.msra.mxu0 0
        %1073 = vmatprep.subr.bf16.mxu0 0
        %1074 = vmatpush1.bf16.xpose.msra.mxu0 0
        %1075 = vmatprep.subr.bf16.mxu0 0
        %1076 = vmatpush1.bf16.xpose.msra.mxu0 %v1059
        %1077 = vmatprep.subr.bf16.mxu0 0
        %1078 = vmatpush2.bf16.xpose.msra.mxu0 0
        %1079 = vmatprep.subr.bf16.mxu0 0
        %1080 = vmatpush2.bf16.xpose.msra.mxu0 0
        %1081 = vmatprep.subr.bf16.mxu0 0
        %1082 = vmatpush2.bf16.xpose.msra.mxu0 0
        %1083 = vmatprep.subr.bf16.mxu0 0
        %1084 = vmatpush2.bf16.xpose.msra.mxu0 0
        %1085 = vmatprep.subr.bf16.mxu0 0
        %1086 = vmatpush2.bf16.xpose.msra.mxu0 0
        %1087 = vmatprep.subr.bf16.mxu0 0
        %1088 = vmatpush2.bf16.xpose.msra.mxu0 0
        %1089 = vmatprep.subr.bf16.mxu0 0
        %1090 = vmatpush2.bf16.xpose.msra.mxu0 0
        %1091 = vmatprep.subr.bf16.mxu0 0
        %1092 = vmatpush2.bf16.xpose.msra.mxu0 0
        %1093 = vmatprep.mubr.bf16.mxu0 0
        %1094 = vmatmul.mubr.bf16.gmra.mxu0 %v1056
        %v1095 = vpop.f32.mrf.mxu0
        %v1096 = vadd.f32 0.0, %v1095
        %v1097 = vpop.f32.mrf.mxu0
        %v1098 = vpop.f32.mrf.mxu0
        %v1099 = vpop.f32.mrf.mxu0
        %1100 = vdwg.mxu0
        %1102 = vrot.lane.b32.xlu0 %v1048, 64
        %v1103 = vpop.permute.xlu0 %1102
        %v1105 = vsel %vm1054, %v1044, 0
        %v1108 = vsel %vm1054, %v1103, 0
        %1110 = vmatprep.subr.bf16.mxu0 0
        %1111 = vmatpush1.bf16.xpose.msra.mxu0 0
        %1112 = vmatprep.subr.bf16.mxu0 0
        %1113 = vmatpush1.bf16.xpose.msra.mxu0 0
        %1114 = vmatprep.subr.bf16.mxu0 0
        %1115 = vmatpush1.bf16.xpose.msra.mxu0 0
        %1116 = vmatprep.subr.bf16.mxu0 0
        %1117 = vmatpush1.bf16.xpose.msra.mxu0 0
        %1118 = vmatprep.subr.bf16.mxu0 0
        %1119 = vmatpush1.bf16.xpose.msra.mxu0 0
        %1120 = vmatprep.subr.bf16.mxu0 0
        %1121 = vmatpush1.bf16.xpose.msra.mxu0 0
        %1122 = vmatprep.subr.bf16.mxu0 0
        %1123 = vmatpush1.bf16.xpose.msra.mxu0 0
        %1124 = vmatprep.subr.bf16.mxu0 0
        %1125 = vmatpush1.bf16.xpose.msra.mxu0 %v1108
        %1126 = vmatprep.subr.bf16.mxu0 0
        %1127 = vmatpush2.bf16.xpose.msra.mxu0 0
        %1128 = vmatprep.subr.bf16.mxu0 0
        %1129 = vmatpush2.bf16.xpose.msra.mxu0 0
        %1130 = vmatprep.subr.bf16.mxu0 0
        %1131 = vmatpush2.bf16.xpose.msra.mxu0 0
        %1132 = vmatprep.subr.bf16.mxu0 0
        %1133 = vmatpush2.bf16.xpose.msra.mxu0 0
        %1134 = vmatprep.subr.bf16.mxu0 0
        %1135 = vmatpush2.bf16.xpose.msra.mxu0 0
        %1136 = vmatprep.subr.bf16.mxu0 0
        %1137 = vmatpush2.bf16.xpose.msra.mxu0 0
        %1138 = vmatprep.subr.bf16.mxu0 0
        %1139 = vmatpush2.bf16.xpose.msra.mxu0 0
        %1140 = vmatprep.subr.bf16.mxu0 0
        %1141 = vmatpush2.bf16.xpose.msra.mxu0 0
        %1142 = vmatprep.mubr.bf16.mxu0 0
        %1143 = vmatmul.mubr.bf16.gmra.mxu0 %v1105
        %v1144 = vpop.f32.mrf.mxu0
        %v1145 = vadd.f32 0.0, %v1144
        %v1146 = vpop.f32.mrf.mxu0
        %v1147 = vpop.f32.mrf.mxu0
        %v1148 = vpop.f32.mrf.mxu0
        %1149 = vdwg.mxu0
        %1151 = vrot.lane.b32.xlu0 %v1049, 64
        %v1152 = vpop.permute.xlu0 %1151
        %v1154 = vsel %vm1054, %v1045, 0
        %v1157 = vsel %vm1054, %v1152, 0
        %1159 = vmatprep.subr.bf16.mxu0 0
        %1160 = vmatpush1.bf16.xpose.msra.mxu0 0
        %1161 = vmatprep.subr.bf16.mxu0 0
        %1162 = vmatpush1.bf16.xpose.msra.mxu0 0
        %1163 = vmatprep.subr.bf16.mxu0 0
        %1164 = vmatpush1.bf16.xpose.msra.mxu0 0
        %1165 = vmatprep.subr.bf16.mxu0 0
        %1166 = vmatpush1.bf16.xpose.msra.mxu0 0
        %1167 = vmatprep.subr.bf16.mxu0 0
        %1168 = vmatpush1.bf16.xpose.msra.mxu0 0
        %1169 = vmatprep.subr.bf16.mxu0 0
        %1170 = vmatpush1.bf16.xpose.msra.mxu0 0
        %1171 = vmatprep.subr.bf16.mxu0 0
        %1172 = vmatpush1.bf16.xpose.msra.mxu0 0
        %1173 = vmatprep.subr.bf16.mxu0 0
        %1174 = vmatpush1.bf16.xpose.msra.mxu0 %v1157
        %1175 = vmatprep.subr.bf16.mxu0 0
        %1176 = vmatpush2.bf16.xpose.msra.mxu0 0
        %1177 = vmatprep.subr.bf16.mxu0 0
        %1178 = vmatpush2.bf16.xpose.msra.mxu0 0
        %1179 = vmatprep.subr.bf16.mxu0 0
        %1180 = vmatpush2.bf16.xpose.msra.mxu0 0
        %1181 = vmatprep.subr.bf16.mxu0 0
        %1182 = vmatpush2.bf16.xpose.msra.mxu0 0
        %1183 = vmatprep.subr.bf16.mxu0 0
        %1184 = vmatpush2.bf16.xpose.msra.mxu0 0
        %1185 = vmatprep.subr.bf16.mxu0 0
        %1186 = vmatpush2.bf16.xpose.msra.mxu0 0
        %1187 = vmatprep.subr.bf16.mxu0 0
        %1188 = vmatpush2.bf16.xpose.msra.mxu0 0
        %1189 = vmatprep.subr.bf16.mxu0 0
        %1190 = vmatpush2.bf16.xpose.msra.mxu0 0
        %1191 = vmatprep.mubr.bf16.mxu0 0
        %1192 = vmatmul.mubr.bf16.gmra.mxu0 %v1154
        %v1193 = vpop.f32.mrf.mxu0
        %v1194 = vadd.f32 0.0, %v1193
        %v1195 = vpop.f32.mrf.mxu0
        %v1196 = vpop.f32.mrf.mxu0
        %v1197 = vpop.f32.mrf.mxu0
        %1198 = vdwg.mxu0
        %1200 = vrot.lane.b32.xlu0 %v1050, 64
        %v1201 = vpop.permute.xlu0 %1200
        %v1203 = vsel %vm1054, %v1046, 0
        %v1206 = vsel %vm1054, %v1201, 0
        %1208 = vmatprep.subr.bf16.mxu0 0
        %1209 = vmatpush1.bf16.xpose.msra.mxu0 0
        %1210 = vmatprep.subr.bf16.mxu0 0
        %1211 = vmatpush1.bf16.xpose.msra.mxu0 0
        %1212 = vmatprep.subr.bf16.mxu0 0
        %1213 = vmatpush1.bf16.xpose.msra.mxu0 0
        %1214 = vmatprep.subr.bf16.mxu0 0
        %1215 = vmatpush1.bf16.xpose.msra.mxu0 0
        %1216 = vmatprep.subr.bf16.mxu0 0
        %1217 = vmatpush1.bf16.xpose.msra.mxu0 0
        %1218 = vmatprep.subr.bf16.mxu0 0
        %1219 = vmatpush1.bf16.xpose.msra.mxu0 0
        %1220 = vmatprep.subr.bf16.mxu0 0
        %1221 = vmatpush1.bf16.xpose.msra.mxu0 0
        %1222 = vmatprep.subr.bf16.mxu0 0
        %1223 = vmatpush1.bf16.xpose.msra.mxu0 %v1206
        %1224 = vmatprep.subr.bf16.mxu0 0
        %1225 = vmatpush2.bf16.xpose.msra.mxu0 0
        %1226 = vmatprep.subr.bf16.mxu0 0
        %1227 = vmatpush2.bf16.xpose.msra.mxu0 0
        %1228 = vmatprep.subr.bf16.mxu0 0
        %1229 = vmatpush2.bf16.xpose.msra.mxu0 0
        %1230 = vmatprep.subr.bf16.mxu0 0
        %1231 = vmatpush2.bf16.xpose.msra.mxu0 0
        %1232 = vmatprep.subr.bf16.mxu0 0
        %1233 = vmatpush2.bf16.xpose.msra.mxu0 0
        %1234 = vmatprep.subr.bf16.mxu0 0
        %1235 = vmatpush2.bf16.xpose.msra.mxu0 0
        %1236 = vmatprep.subr.bf16.mxu0 0
        %1237 = vmatpush2.bf16.xpose.msra.mxu0 0
        %1238 = vmatprep.subr.bf16.mxu0 0
        %1239 = vmatpush2.bf16.xpose.msra.mxu0 0
        %1240 = vmatprep.mubr.bf16.mxu0 0
        %1241 = vmatmul.mubr.bf16.gmra.mxu0 %v1203
        %v1242 = vpop.f32.mrf.mxu0
        %v1243 = vadd.f32 0.0, %v1242
        %v1244 = vpop.f32.mrf.mxu0
        %v1245 = vpop.f32.mrf.mxu0
        %v1246 = vpop.f32.mrf.mxu0
        %1247 = vdwg.mxu0
        %v1248 = vmul.f32 %v1096, 0.17677669
        %v1249 = vmul.f32 %v1145, 0.17677669
        %v1250 = vmul.f32 %v1194, 0.17677669
        %v1251 = vmul.f32 %v1243, 0.17677669
        %v1252 = vadd.f32 %v1248, %v408
        %v1253 = vadd.f32 %v1249, %v408
        %v1254 = vadd.f32 %v1250, %v408
        %v1255 = vadd.f32 %v1251, %v408
        %vm1256 = vcmask 64512
        %v1257 = vsel %vm1256, %v1252, -inf
        %1258 = vmax.xlane.f32.xlu0 %v1257
        %v1259 = vpop.xlane.xlu0 %1258
        %v1260 = vsel %vm1256, %v1253, -inf
        %1261 = vmax.xlane.f32.xlu0 %v1260
        %v1262 = vpop.xlane.xlu0 %1261
        %v1263 = vsel %vm1256, %v1254, -inf
        %1264 = vmax.xlane.f32.xlu0 %v1263
        %v1265 = vpop.xlane.xlu0 %1264
        %v1266 = vsel %vm1256, %v1255, -inf
        %1267 = vmax.xlane.f32.xlu0 %v1266
        %v1268 = vpop.xlane.xlu0 %1267
        %v1269 = vsub.f32 %v1252, %v1259
        %v1270 = vsub.f32 %v1253, %v1262
        %v1271 = vsub.f32 %v1254, %v1265
        %v1272 = vsub.f32 %v1255, %v1268
        %v1273 = vmul.f32 %v1269, 1.442695
        %v1274 = vpow.pop %v1273
        %v1275 = vmul.f32 %v1270, 1.442695
        %v1276 = vpow.pop %v1275
        %v1277 = vmul.f32 %v1271, 1.442695
        %v1278 = vpow.pop %v1277
        %v1279 = vmul.f32 %v1272, 1.442695
        %v1280 = vpow.pop %v1279
        %v1281 = vsel %vm1256, %v1274, 0.0
        %1282 = vadd.xlane.f32.xlu0 %v1281
        %v1283 = vpop.xlane.xlu0 %1282
        %v1284 = vsel %vm1256, %v1276, 0.0
        %1285 = vadd.xlane.f32.xlu0 %v1284
        %v1286 = vpop.xlane.xlu0 %1285
        %v1287 = vsel %vm1256, %v1278, 0.0
        %1288 = vadd.xlane.f32.xlu0 %v1287
        %v1289 = vpop.xlane.xlu0 %1288
        %v1290 = vsel %vm1256, %v1280, 0.0
        %1291 = vadd.xlane.f32.xlu0 %v1290
        %v1292 = vpop.xlane.xlu0 %1291
        %v1293 = vpack.c.bf16 %v1274, %v1274
        %v1294 = vpack.c.bf16 %v1276, %v1276
        %v1295 = vpack.c.bf16 %v1278, %v1278
        %v1296 = vpack.c.bf16 %v1280, %v1280
        %v1297 = vpack.c.bf16 %v609, %v609
        %v1298 = vpack.c.bf16 %v730, %v730
        %v1299 = vpack.c.bf16 %v851, %v851
        %v1300 = vpack.c.bf16 %v972, %v972
        %v1302 = vsel %vm1256, %v1293, 0
        %vm1304 = vcmask 1043456
        %v1306 = vsel %vm1304, %v1297, 0
        %1308 = vmatprep.subr.bf16.mxu0 0
        %1309 = vmatpush1.bf16.msra.mxu0 0
        %1310 = vmatprep.subr.bf16.mxu0 0
        %1311 = vmatpush1.bf16.msra.mxu0 0
        %1312 = vmatprep.subr.bf16.mxu0 0
        %1313 = vmatpush1.bf16.msra.mxu0 0
        %1314 = vmatprep.subr.bf16.mxu0 0
        %1315 = vmatpush1.bf16.msra.mxu0 0
        %1316 = vmatprep.subr.bf16.mxu0 0
        %1317 = vmatpush1.bf16.msra.mxu0 0
        %1318 = vmatprep.subr.bf16.mxu0 0
        %1319 = vmatpush1.bf16.msra.mxu0 0
        %1320 = vmatprep.subr.bf16.mxu0 0
        %1321 = vmatpush1.bf16.msra.mxu0 0
        %1322 = vmatprep.subr.bf16.mxu0 0
        %1323 = vmatpush1.bf16.msra.mxu0 %v1306
        %1324 = vmatprep.subr.bf16.mxu0 0
        %1325 = vmatpush2.bf16.msra.mxu0 0
        %1326 = vmatprep.subr.bf16.mxu0 0
        %1327 = vmatpush2.bf16.msra.mxu0 0
        %1328 = vmatprep.subr.bf16.mxu0 0
        %1329 = vmatpush2.bf16.msra.mxu0 0
        %1330 = vmatprep.subr.bf16.mxu0 0
        %1331 = vmatpush2.bf16.msra.mxu0 0
        %1332 = vmatprep.subr.bf16.mxu0 0
        %1333 = vmatpush2.bf16.msra.mxu0 0
        %1334 = vmatprep.subr.bf16.mxu0 0
        %1335 = vmatpush2.bf16.msra.mxu0 0
        %1336 = vmatprep.subr.bf16.mxu0 0
        %1337 = vmatpush2.bf16.msra.mxu0 0
        %1338 = vmatprep.subr.bf16.mxu0 0
        %1339 = vmatpush2.bf16.msra.mxu0 0
        %1340 = vmatprep.mubr.bf16.mxu0 0
        %1341 = vmatmul.mubr.bf16.gmra.mxu0 %v1302
        %v1342 = vpop.f32.mrf.mxu0
        %v1343 = vadd.f32 0.0, %v1342
        %v1344 = vpop.f32.mrf.mxu0
        %v1345 = vpop.f32.mrf.mxu0
        %v1346 = vpop.f32.mrf.mxu0
        %1347 = vdwg.mxu0
        %v1349 = vsel %vm1256, %v1294, 0
        %v1352 = vsel %vm1304, %v1298, 0
        %1354 = vmatprep.subr.bf16.mxu0 0
        %1355 = vmatpush1.bf16.msra.mxu0 0
        %1356 = vmatprep.subr.bf16.mxu0 0
        %1357 = vmatpush1.bf16.msra.mxu0 0
        %1358 = vmatprep.subr.bf16.mxu0 0
        %1359 = vmatpush1.bf16.msra.mxu0 0
        %1360 = vmatprep.subr.bf16.mxu0 0
        %1361 = vmatpush1.bf16.msra.mxu0 0
        %1362 = vmatprep.subr.bf16.mxu0 0
        %1363 = vmatpush1.bf16.msra.mxu0 0
        %1364 = vmatprep.subr.bf16.mxu0 0
        %1365 = vmatpush1.bf16.msra.mxu0 0
        %1366 = vmatprep.subr.bf16.mxu0 0
        %1367 = vmatpush1.bf16.msra.mxu0 0
        %1368 = vmatprep.subr.bf16.mxu0 0
        %1369 = vmatpush1.bf16.msra.mxu0 %v1352
        %1370 = vmatprep.subr.bf16.mxu0 0
        %1371 = vmatpush2.bf16.msra.mxu0 0
        %1372 = vmatprep.subr.bf16.mxu0 0
        %1373 = vmatpush2.bf16.msra.mxu0 0
        %1374 = vmatprep.subr.bf16.mxu0 0
        %1375 = vmatpush2.bf16.msra.mxu0 0
        %1376 = vmatprep.subr.bf16.mxu0 0
        %1377 = vmatpush2.bf16.msra.mxu0 0
        %1378 = vmatprep.subr.bf16.mxu0 0
        %1379 = vmatpush2.bf16.msra.mxu0 0
        %1380 = vmatprep.subr.bf16.mxu0 0
        %1381 = vmatpush2.bf16.msra.mxu0 0
        %1382 = vmatprep.subr.bf16.mxu0 0
        %1383 = vmatpush2.bf16.msra.mxu0 0
        %1384 = vmatprep.subr.bf16.mxu0 0
        %1385 = vmatpush2.bf16.msra.mxu0 0
        %1386 = vmatprep.mubr.bf16.mxu0 0
        %1387 = vmatmul.mubr.bf16.gmra.mxu0 %v1349
        %v1388 = vpop.f32.mrf.mxu0
        %v1389 = vadd.f32 0.0, %v1388
        %v1390 = vpop.f32.mrf.mxu0
        %v1391 = vpop.f32.mrf.mxu0
        %v1392 = vpop.f32.mrf.mxu0
        %1393 = vdwg.mxu0
        %v1395 = vsel %vm1256, %v1295, 0
        %v1398 = vsel %vm1304, %v1299, 0
        %1400 = vmatprep.subr.bf16.mxu0 0
        %1401 = vmatpush1.bf16.msra.mxu0 0
        %1402 = vmatprep.subr.bf16.mxu0 0
        %1403 = vmatpush1.bf16.msra.mxu0 0
        %1404 = vmatprep.subr.bf16.mxu0 0
        %1405 = vmatpush1.bf16.msra.mxu0 0
        %1406 = vmatprep.subr.bf16.mxu0 0
        %1407 = vmatpush1.bf16.msra.mxu0 0
        %1408 = vmatprep.subr.bf16.mxu0 0
        %1409 = vmatpush1.bf16.msra.mxu0 0
        %1410 = vmatprep.subr.bf16.mxu0 0
        %1411 = vmatpush1.bf16.msra.mxu0 0
        %1412 = vmatprep.subr.bf16.mxu0 0
        %1413 = vmatpush1.bf16.msra.mxu0 0
        %1414 = vmatprep.subr.bf16.mxu0 0
        %1415 = vmatpush1.bf16.msra.mxu0 %v1398
        %1416 = vmatprep.subr.bf16.mxu0 0
        %1417 = vmatpush2.bf16.msra.mxu0 0
        %1418 = vmatprep.subr.bf16.mxu0 0
        %1419 = vmatpush2.bf16.msra.mxu0 0
        %1420 = vmatprep.subr.bf16.mxu0 0
        %1421 = vmatpush2.bf16.msra.mxu0 0
        %1422 = vmatprep.subr.bf16.mxu0 0
        %1423 = vmatpush2.bf16.msra.mxu0 0
        %1424 = vmatprep.subr.bf16.mxu0 0
        %1425 = vmatpush2.bf16.msra.mxu0 0
        %1426 = vmatprep.subr.bf16.mxu0 0
        %1427 = vmatpush2.bf16.msra.mxu0 0
        %1428 = vmatprep.subr.bf16.mxu0 0
        %1429 = vmatpush2.bf16.msra.mxu0 0
        %1430 = vmatprep.subr.bf16.mxu0 0
        %1431 = vmatpush2.bf16.msra.mxu0 0
        %1432 = vmatprep.mubr.bf16.mxu0 0
        %1433 = vmatmul.mubr.bf16.gmra.mxu0 %v1395
        %v1434 = vpop.f32.mrf.mxu0
        %v1435 = vadd.f32 0.0, %v1434
        %v1436 = vpop.f32.mrf.mxu0
        %v1437 = vpop.f32.mrf.mxu0
        %v1438 = vpop.f32.mrf.mxu0
        %1439 = vdwg.mxu0
        %v1441 = vsel %vm1256, %v1296, 0
        %v1444 = vsel %vm1304, %v1300, 0
        %1446 = vmatprep.subr.bf16.mxu0 0
        %1447 = vmatpush1.bf16.msra.mxu0 0
        %1448 = vmatprep.subr.bf16.mxu0 0
        %1449 = vmatpush1.bf16.msra.mxu0 0
        %1450 = vmatprep.subr.bf16.mxu0 0
        %1451 = vmatpush1.bf16.msra.mxu0 0
        %1452 = vmatprep.subr.bf16.mxu0 0
        %1453 = vmatpush1.bf16.msra.mxu0 0
        %1454 = vmatprep.subr.bf16.mxu0 0
        %1455 = vmatpush1.bf16.msra.mxu0 0
        %1456 = vmatprep.subr.bf16.mxu0 0
        %1457 = vmatpush1.bf16.msra.mxu0 0
        %1458 = vmatprep.subr.bf16.mxu0 0
        %1459 = vmatpush1.bf16.msra.mxu0 0
        %1460 = vmatprep.subr.bf16.mxu0 0
        %1461 = vmatpush1.bf16.msra.mxu0 %v1444
        %1462 = vmatprep.subr.bf16.mxu0 0
        %1463 = vmatpush2.bf16.msra.mxu0 0
        %1464 = vmatprep.subr.bf16.mxu0 0
        %1465 = vmatpush2.bf16.msra.mxu0 0
        %1466 = vmatprep.subr.bf16.mxu0 0
        %1467 = vmatpush2.bf16.msra.mxu0 0
        %1468 = vmatprep.subr.bf16.mxu0 0
        %1469 = vmatpush2.bf16.msra.mxu0 0
        %1470 = vmatprep.subr.bf16.mxu0 0
        %1471 = vmatpush2.bf16.msra.mxu0 0
        %1472 = vmatprep.subr.bf16.mxu0 0
        %1473 = vmatpush2.bf16.msra.mxu0 0
        %1474 = vmatprep.subr.bf16.mxu0 0
        %1475 = vmatpush2.bf16.msra.mxu0 0
        %1476 = vmatprep.subr.bf16.mxu0 0
        %1477 = vmatpush2.bf16.msra.mxu0 0
        %1478 = vmatprep.mubr.bf16.mxu0 0
        %1479 = vmatmul.mubr.bf16.gmra.mxu0 %v1441
        %v1480 = vpop.f32.mrf.mxu0
        %v1481 = vadd.f32 0.0, %v1480
        %v1482 = vpop.f32.mrf.mxu0
        %v1483 = vpop.f32.mrf.mxu0
        %v1484 = vpop.f32.mrf.mxu0
        %1485 = vdwg.mxu0
        %v1486 = vrcp.pop %v1283
        %v1487 = vrcp.pop %v1286
        %v1488 = vrcp.pop %v1289
        %v1489 = vrcp.pop %v1292
        %v1490 = vmul.f32 %v1343, %v1486
        %v1491 = vmul.f32 %v1389, %v1487
        %v1492 = vmul.f32 %v1435, %v1488
        %v1493 = vmul.f32 %v1481, %v1489
        %v1494 = vpack.c.bf16 %v1490, %v1490
        %v1495 = vpack.c.bf16 %v1491, %v1491
        %v1496 = vpack.c.bf16 %v1492, %v1492
        %v1497 = vpack.c.bf16 %v1493, %v1493
        %v1498 = vld [vmem:[%s5] sm:$0xf]
        %v1499 = vld [vmem:[%s5 + $0x4] sm:$0xf]
        %v1500 = vld [vmem:[%s5 + $0x8] sm:$0xf]
        %v1501 = vld [vmem:[%s5 + $0xc] sm:$0xf]
        %v1502 = vld [vmem:[%s5 + $0x10] sm:$0xf]
        %v1503 = vld [vmem:[%s5 + $0x14] sm:$0xf]
        %v1504 = vld [vmem:[%s5 + $0x18] sm:$0xf]
        %v1505 = vld [vmem:[%s5 + $0x1c] sm:$0xf]
        %v1506 = vld [vmem:[%s5 + $0x20] sm:$0xf]
        %v1507 = vld [vmem:[%s5 + $0x24] sm:$0xf]
        %v1508 = vld [vmem:[%s5 + $0x28] sm:$0xf]
        %v1509 = vld [vmem:[%s5 + $0x2c] sm:$0xf]
        %v1510 = vld [vmem:[%s5 + $0x30] sm:$0xf]
        %v1511 = vld [vmem:[%s5 + $0x34] sm:$0xf]
        %v1512 = vld [vmem:[%s5 + $0x38] sm:$0xf]
        %v1513 = vld [vmem:[%s5 + $0x3c] sm:$0xf]
        %v1518 = vunpack.c.l.b16 %v1498
        %v1519 = vunpack.c.l.b16 %v1499
        %v1520 = vunpack.c.l.b16 %v1500
        %v1521 = vunpack.c.l.b16 %v1501
        %v1522 = vpack.c.b16 %v1519, %v1518
        %v1523 = vpack.c.b16 %v1521, %v1520
        %v1527 = vsel %vm1054, %v1494, 0
        %1529 = vmatprep.subr.bf16.mxu0 0
        %1530 = vmatpush1.bf16.msra.mxu0 0
        %1531 = vmatprep.subr.bf16.mxu0 0
        %1532 = vmatpush1.bf16.msra.mxu0 0
        %1533 = vmatprep.subr.bf16.mxu0 0
        %1534 = vmatpush1.bf16.msra.mxu0 0
        %1535 = vmatprep.subr.bf16.mxu0 0
        %1536 = vmatpush1.bf16.msra.mxu0 0
        %1537 = vmatprep.subr.bf16.mxu0 0
        %1538 = vmatpush1.bf16.msra.mxu0 0
        %1539 = vmatprep.subr.bf16.mxu0 0
        %1540 = vmatpush1.bf16.msra.mxu0 0
        %1541 = vmatprep.subr.bf16.mxu0 0
        %1542 = vmatpush1.bf16.msra.mxu0 %v1523
        %1543 = vmatprep.subr.bf16.mxu0 0
        %1544 = vmatpush1.bf16.msra.mxu0 %v1522
        %1545 = vmatprep.subr.bf16.mxu0 0
        %1546 = vmatpush2.bf16.msra.mxu0 0
        %1547 = vmatprep.subr.bf16.mxu0 0
        %1548 = vmatpush2.bf16.msra.mxu0 0
        %1549 = vmatprep.subr.bf16.mxu0 0
        %1550 = vmatpush2.bf16.msra.mxu0 0
        %1551 = vmatprep.subr.bf16.mxu0 0
        %1552 = vmatpush2.bf16.msra.mxu0 0
        %1553 = vmatprep.subr.bf16.mxu0 0
        %1554 = vmatpush2.bf16.msra.mxu0 0
        %1555 = vmatprep.subr.bf16.mxu0 0
        %1556 = vmatpush2.bf16.msra.mxu0 0
        %1557 = vmatprep.subr.bf16.mxu0 0
        %1558 = vmatpush2.bf16.msra.mxu0 0
        %1559 = vmatprep.subr.bf16.mxu0 0
        %1560 = vmatpush2.bf16.msra.mxu0 0
        %1561 = vmatprep.mubr.bf16.mxu0 0
        %1562 = vmatmul.mubr.bf16.gmra.mxu0 %v1527
        %v1563 = vpop.f32.mrf.mxu0
        %v1564 = vadd.f32 0.0, %v1563
        %v1565 = vpop.f32.mrf.mxu0
        %v1566 = vpop.f32.mrf.mxu0
        %v1567 = vpop.f32.mrf.mxu0
        %1568 = vdwg.mxu0
        %v1573 = vunpack.c.l.b16 %v1502
        %v1574 = vunpack.c.l.b16 %v1503
        %v1575 = vunpack.c.l.b16 %v1504
        %v1576 = vunpack.c.l.b16 %v1505
        %v1577 = vpack.c.b16 %v1574, %v1573
        %v1578 = vpack.c.b16 %v1576, %v1575
        %v1582 = vsel %vm1054, %v1495, 0
        %1584 = vmatprep.subr.bf16.mxu0 0
        %1585 = vmatpush1.bf16.msra.mxu0 0
        %1586 = vmatprep.subr.bf16.mxu0 0
        %1587 = vmatpush1.bf16.msra.mxu0 0
        %1588 = vmatprep.subr.bf16.mxu0 0
        %1589 = vmatpush1.bf16.msra.mxu0 0
        %1590 = vmatprep.subr.bf16.mxu0 0
        %1591 = vmatpush1.bf16.msra.mxu0 0
        %1592 = vmatprep.subr.bf16.mxu0 0
        %1593 = vmatpush1.bf16.msra.mxu0 0
        %1594 = vmatprep.subr.bf16.mxu0 0
        %1595 = vmatpush1.bf16.msra.mxu0 0
        %1596 = vmatprep.subr.bf16.mxu0 0
        %1597 = vmatpush1.bf16.msra.mxu0 %v1578
        %1598 = vmatprep.subr.bf16.mxu0 0
        %1599 = vmatpush1.bf16.msra.mxu0 %v1577
        %1600 = vmatprep.subr.bf16.mxu0 0
        %1601 = vmatpush2.bf16.msra.mxu0 0
        %1602 = vmatprep.subr.bf16.mxu0 0
        %1603 = vmatpush2.bf16.msra.mxu0 0
        %1604 = vmatprep.subr.bf16.mxu0 0
        %1605 = vmatpush2.bf16.msra.mxu0 0
        %1606 = vmatprep.subr.bf16.mxu0 0
        %1607 = vmatpush2.bf16.msra.mxu0 0
        %1608 = vmatprep.subr.bf16.mxu0 0
        %1609 = vmatpush2.bf16.msra.mxu0 0
        %1610 = vmatprep.subr.bf16.mxu0 0
        %1611 = vmatpush2.bf16.msra.mxu0 0
        %1612 = vmatprep.subr.bf16.mxu0 0
        %1613 = vmatpush2.bf16.msra.mxu0 0
        %1614 = vmatprep.subr.bf16.mxu0 0
        %1615 = vmatpush2.bf16.msra.mxu0 0
        %1616 = vmatprep.mubr.bf16.mxu0 0
        %1617 = vmatmul.mubr.bf16.gmra.mxu0 %v1582
        %v1618 = vpop.f32.mrf.mxu0
        %v1619 = vadd.f32 0.0, %v1618
        %v1620 = vpop.f32.mrf.mxu0
        %v1621 = vpop.f32.mrf.mxu0
        %v1622 = vpop.f32.mrf.mxu0
        %1623 = vdwg.mxu0
        %v1628 = vunpack.c.l.b16 %v1506
        %v1629 = vunpack.c.l.b16 %v1507
        %v1630 = vunpack.c.l.b16 %v1508
        %v1631 = vunpack.c.l.b16 %v1509
        %v1632 = vpack.c.b16 %v1629, %v1628
        %v1633 = vpack.c.b16 %v1631, %v1630
        %v1637 = vsel %vm1054, %v1496, 0
        %1639 = vmatprep.subr.bf16.mxu0 0
        %1640 = vmatpush1.bf16.msra.mxu0 0
        %1641 = vmatprep.subr.bf16.mxu0 0
        %1642 = vmatpush1.bf16.msra.mxu0 0
        %1643 = vmatprep.subr.bf16.mxu0 0
        %1644 = vmatpush1.bf16.msra.mxu0 0
        %1645 = vmatprep.subr.bf16.mxu0 0
        %1646 = vmatpush1.bf16.msra.mxu0 0
        %1647 = vmatprep.subr.bf16.mxu0 0
        %1648 = vmatpush1.bf16.msra.mxu0 0
        %1649 = vmatprep.subr.bf16.mxu0 0
        %1650 = vmatpush1.bf16.msra.mxu0 0
        %1651 = vmatprep.subr.bf16.mxu0 0
        %1652 = vmatpush1.bf16.msra.mxu0 %v1633
        %1653 = vmatprep.subr.bf16.mxu0 0
        %1654 = vmatpush1.bf16.msra.mxu0 %v1632
        %1655 = vmatprep.subr.bf16.mxu0 0
        %1656 = vmatpush2.bf16.msra.mxu0 0
        %1657 = vmatprep.subr.bf16.mxu0 0
        %1658 = vmatpush2.bf16.msra.mxu0 0
        %1659 = vmatprep.subr.bf16.mxu0 0
        %1660 = vmatpush2.bf16.msra.mxu0 0
        %1661 = vmatprep.subr.bf16.mxu0 0
        %1662 = vmatpush2.bf16.msra.mxu0 0
        %1663 = vmatprep.subr.bf16.mxu0 0
        %1664 = vmatpush2.bf16.msra.mxu0 0
        %1665 = vmatprep.subr.bf16.mxu0 0
        %1666 = vmatpush2.bf16.msra.mxu0 0
        %1667 = vmatprep.subr.bf16.mxu0 0
        %1668 = vmatpush2.bf16.msra.mxu0 0
        %1669 = vmatprep.subr.bf16.mxu0 0
        %1670 = vmatpush2.bf16.msra.mxu0 0
        %1671 = vmatprep.mubr.bf16.mxu0 0
        %1672 = vmatmul.mubr.bf16.gmra.mxu0 %v1637
        %v1673 = vpop.f32.mrf.mxu0
        %v1674 = vadd.f32 0.0, %v1673
        %v1675 = vpop.f32.mrf.mxu0
        %v1676 = vpop.f32.mrf.mxu0
        %v1677 = vpop.f32.mrf.mxu0
        %1678 = vdwg.mxu0
        %v1683 = vunpack.c.l.b16 %v1510
        %v1684 = vunpack.c.l.b16 %v1511
        %v1685 = vunpack.c.l.b16 %v1512
        %v1686 = vunpack.c.l.b16 %v1513
        %v1687 = vpack.c.b16 %v1684, %v1683
        %v1688 = vpack.c.b16 %v1686, %v1685
        %v1692 = vsel %vm1054, %v1497, 0
        %1694 = vmatprep.subr.bf16.mxu0 0
        %1695 = vmatpush1.bf16.msra.mxu0 0
        %1696 = vmatprep.subr.bf16.mxu0 0
        %1697 = vmatpush1.bf16.msra.mxu0 0
        %1698 = vmatprep.subr.bf16.mxu0 0
        %1699 = vmatpush1.bf16.msra.mxu0 0
        %1700 = vmatprep.subr.bf16.mxu0 0
        %1701 = vmatpush1.bf16.msra.mxu0 0
        %1702 = vmatprep.subr.bf16.mxu0 0
        %1703 = vmatpush1.bf16.msra.mxu0 0
        %1704 = vmatprep.subr.bf16.mxu0 0
        %1705 = vmatpush1.bf16.msra.mxu0 0
        %1706 = vmatprep.subr.bf16.mxu0 0
        %1707 = vmatpush1.bf16.msra.mxu0 %v1688
        %1708 = vmatprep.subr.bf16.mxu0 0
        %1709 = vmatpush1.bf16.msra.mxu0 %v1687
        %1710 = vmatprep.subr.bf16.mxu0 0
        %1711 = vmatpush2.bf16.msra.mxu0 0
        %1712 = vmatprep.subr.bf16.mxu0 0
        %1713 = vmatpush2.bf16.msra.mxu0 0
        %1714 = vmatprep.subr.bf16.mxu0 0
        %1715 = vmatpush2.bf16.msra.mxu0 0
        %1716 = vmatprep.subr.bf16.mxu0 0
        %1717 = vmatpush2.bf16.msra.mxu0 0
        %1718 = vmatprep.subr.bf16.mxu0 0
        %1719 = vmatpush2.bf16.msra.mxu0 0
        %1720 = vmatprep.subr.bf16.mxu0 0
        %1721 = vmatpush2.bf16.msra.mxu0 0
        %1722 = vmatprep.subr.bf16.mxu0 0
        %1723 = vmatpush2.bf16.msra.mxu0 0
        %1724 = vmatprep.subr.bf16.mxu0 0
        %1725 = vmatpush2.bf16.msra.mxu0 0
        %1726 = vmatprep.mubr.bf16.mxu0 0
        %1727 = vmatmul.mubr.bf16.gmra.mxu0 %v1692
        %v1728 = vpop.f32.mrf.mxu0
        %v1729 = vadd.f32 0.0, %v1728
        %v1730 = vpop.f32.mrf.mxu0
        %v1731 = vpop.f32.mrf.mxu0
        %v1732 = vpop.f32.mrf.mxu0
        %1733 = vdwg.mxu0
        %v1734 = vadd.f32 %v1564, %v1619
        %v1735 = vadd.f32 %v1734, %v1674
        %v1736 = vadd.f32 %v1735, %v1729
        %v1737 = vadd.f32 %v407, %v1736
        %v1738 = vld [vmem:[%s9] sm:$0x1]
        %v1739 = vmul.f32 %v1737, %v1737
        %1740 = vadd.xlane.f32.xlu0 %v1739
        %v1741 = vpop.xlane.xlu0 %1740
        %v1742 = vmul.f32 %v1741, %v415
        %v1743 = vadd.f32 %v1742, 1e-06
        %v1744 = vrsqrt.pop %v1743
        %v1745 = vmul.f32 %v1737, %v1744
        %v1747 = vlaneseq
        %v1748 = vshrl.u32 %v1747, 7
        %v1749 = vsub.s32 0, %v1748
        %v1750 = vrot.slane %v1738, %v1749
        %v1752 = vmul.f32 %v1745, %v1750
        %v1753 = vpack.c.bf16 %v1752, %v1752
        %v1754 = vld [vmem:[%s6] sm:$0xff]
        %v1755 = vld [vmem:[%s6 + $0x8] sm:$0xff]
        %v1756 = vld [vmem:[%s6 + $0x10] sm:$0xff]
        %v1757 = vld [vmem:[%s6 + $0x18] sm:$0xff]
        %v1758 = vld [vmem:[%s6 + $0x20] sm:$0xff]
        %v1759 = vld [vmem:[%s6 + $0x28] sm:$0xff]
        %v1760 = vld [vmem:[%s6 + $0x30] sm:$0xff]
        %v1761 = vld [vmem:[%s6 + $0x38] sm:$0xff]
        %v1762 = vld [vmem:[%s6 + $0x40] sm:$0xff]
        %v1763 = vld [vmem:[%s6 + $0x48] sm:$0xff]
        %v1764 = vld [vmem:[%s6 + $0x50] sm:$0xff]
        %v1765 = vld [vmem:[%s6 + $0x58] sm:$0xff]
        %v1766 = vld [vmem:[%s6 + $0x60] sm:$0xff]
        %v1767 = vld [vmem:[%s6 + $0x68] sm:$0xff]
        %v1768 = vld [vmem:[%s6 + $0x70] sm:$0xff]
        %v1769 = vld [vmem:[%s6 + $0x78] sm:$0xff]
        %v1770 = vld [vmem:[%s6 + $0x80] sm:$0xff]
        %v1771 = vld [vmem:[%s6 + $0x88] sm:$0xff]
        %v1772 = vld [vmem:[%s6 + $0x90] sm:$0xff]
        %v1773 = vld [vmem:[%s6 + $0x98] sm:$0xff]
        %v1774 = vld [vmem:[%s6 + $0xa0] sm:$0xff]
        %v1775 = vld [vmem:[%s6 + $0xa8] sm:$0xff]
        %v1776 = vld [vmem:[%s6 + $0xb0] sm:$0xff]
        %v1777 = vld [vmem:[%s6 + $0xb8] sm:$0xff]
        %v1778 = vld [vmem:[%s6 + $0xc0] sm:$0xff]
        %v1779 = vld [vmem:[%s6 + $0xc8] sm:$0xff]
        %v1780 = vld [vmem:[%s6 + $0xd0] sm:$0xff]
        %v1781 = vld [vmem:[%s6 + $0xd8] sm:$0xff]
        %v1782 = vld [vmem:[%s6 + $0xe0] sm:$0xff]
        %v1783 = vld [vmem:[%s6 + $0xe8] sm:$0xff]
        %v1784 = vld [vmem:[%s6 + $0xf0] sm:$0xff]
        %v1785 = vld [vmem:[%s6 + $0xf8] sm:$0xff]
        %v1818 = vunpack.c.l.b16 %v1754
        %v1819 = vunpack.c.h.b16 %v1754
        %v1820 = vunpack.c.l.b16 %v1755
        %v1821 = vunpack.c.h.b16 %v1755
        %v1822 = vunpack.c.l.b16 %v1756
        %v1823 = vunpack.c.h.b16 %v1756
        %v1824 = vunpack.c.l.b16 %v1757
        %v1825 = vunpack.c.h.b16 %v1757
        %v1826 = vunpack.c.l.b16 %v1758
        %v1827 = vunpack.c.h.b16 %v1758
        %v1828 = vunpack.c.l.b16 %v1759
        %v1829 = vunpack.c.h.b16 %v1759
        %v1830 = vunpack.c.l.b16 %v1760
        %v1831 = vunpack.c.h.b16 %v1760
        %v1832 = vunpack.c.l.b16 %v1761
        %v1833 = vunpack.c.h.b16 %v1761
        %v1834 = vunpack.c.l.b16 %v1762
        %v1835 = vunpack.c.h.b16 %v1762
        %v1836 = vunpack.c.l.b16 %v1763
        %v1837 = vunpack.c.h.b16 %v1763
        %v1838 = vunpack.c.l.b16 %v1764
        %v1839 = vunpack.c.h.b16 %v1764
        %v1840 = vunpack.c.l.b16 %v1765
        %v1841 = vunpack.c.h.b16 %v1765
        %v1842 = vunpack.c.l.b16 %v1766
        %v1843 = vunpack.c.h.b16 %v1766
        %v1844 = vunpack.c.l.b16 %v1767
        %v1845 = vunpack.c.h.b16 %v1767
        %v1846 = vunpack.c.l.b16 %v1768
        %v1847 = vunpack.c.h.b16 %v1768
        %v1848 = vunpack.c.l.b16 %v1769
        %v1849 = vunpack.c.h.b16 %v1769
        %v1850 = vunpack.c.l.b16 %v1770
        %v1851 = vunpack.c.h.b16 %v1770
        %v1852 = vunpack.c.l.b16 %v1771
        %v1853 = vunpack.c.h.b16 %v1771
        %v1854 = vunpack.c.l.b16 %v1772
        %v1855 = vunpack.c.h.b16 %v1772
        %v1856 = vunpack.c.l.b16 %v1773
        %v1857 = vunpack.c.h.b16 %v1773
        %v1858 = vunpack.c.l.b16 %v1774
        %v1859 = vunpack.c.h.b16 %v1774
        %v1860 = vunpack.c.l.b16 %v1775
        %v1861 = vunpack.c.h.b16 %v1775
        %v1862 = vunpack.c.l.b16 %v1776
        %v1863 = vunpack.c.h.b16 %v1776
        %v1864 = vunpack.c.l.b16 %v1777
        %v1865 = vunpack.c.h.b16 %v1777
        %v1866 = vunpack.c.l.b16 %v1778
        %v1867 = vunpack.c.h.b16 %v1778
        %v1868 = vunpack.c.l.b16 %v1779
        %v1869 = vunpack.c.h.b16 %v1779
        %v1870 = vunpack.c.l.b16 %v1780
        %v1871 = vunpack.c.h.b16 %v1780
        %v1872 = vunpack.c.l.b16 %v1781
        %v1873 = vunpack.c.h.b16 %v1781
        %v1874 = vunpack.c.l.b16 %v1782
        %v1875 = vunpack.c.h.b16 %v1782
        %v1876 = vunpack.c.l.b16 %v1783
        %v1877 = vunpack.c.h.b16 %v1783
        %v1878 = vunpack.c.l.b16 %v1784
        %v1879 = vunpack.c.h.b16 %v1784
        %v1880 = vunpack.c.l.b16 %v1785
        %v1881 = vunpack.c.h.b16 %v1785
        %v1882 = vpack.c.b16 %v1822, %v1818
        %v1883 = vpack.c.b16 %v1823, %v1819
        %v1884 = vpack.c.b16 %v1824, %v1820
        %v1885 = vpack.c.b16 %v1825, %v1821
        %v1886 = vpack.c.b16 %v1830, %v1826
        %v1887 = vpack.c.b16 %v1831, %v1827
        %v1888 = vpack.c.b16 %v1832, %v1828
        %v1889 = vpack.c.b16 %v1833, %v1829
        %v1890 = vpack.c.b16 %v1838, %v1834
        %v1891 = vpack.c.b16 %v1839, %v1835
        %v1892 = vpack.c.b16 %v1840, %v1836
        %v1893 = vpack.c.b16 %v1841, %v1837
        %v1894 = vpack.c.b16 %v1846, %v1842
        %v1895 = vpack.c.b16 %v1847, %v1843
        %v1896 = vpack.c.b16 %v1848, %v1844
        %v1897 = vpack.c.b16 %v1849, %v1845
        %v1898 = vpack.c.b16 %v1854, %v1850
        %v1899 = vpack.c.b16 %v1855, %v1851
        %v1900 = vpack.c.b16 %v1856, %v1852
        %v1901 = vpack.c.b16 %v1857, %v1853
        %v1902 = vpack.c.b16 %v1862, %v1858
        %v1903 = vpack.c.b16 %v1863, %v1859
        %v1904 = vpack.c.b16 %v1864, %v1860
        %v1905 = vpack.c.b16 %v1865, %v1861
        %v1906 = vpack.c.b16 %v1870, %v1866
        %v1907 = vpack.c.b16 %v1871, %v1867
        %v1908 = vpack.c.b16 %v1872, %v1868
        %v1909 = vpack.c.b16 %v1873, %v1869
        %v1910 = vpack.c.b16 %v1878, %v1874
        %v1911 = vpack.c.b16 %v1879, %v1875
        %v1912 = vpack.c.b16 %v1880, %v1876
        %v1913 = vpack.c.b16 %v1881, %v1877
        %1946 = vmatprep.subr.bf16.mxu0 %v1911
        %1947 = vmatpush1.bf16.msra.mxu0 %v1910
        %1948 = vmatprep.subr.bf16.mxu0 %v1907
        %1949 = vmatpush1.bf16.msra.mxu0 %v1906
        %1950 = vmatprep.subr.bf16.mxu0 %v1903
        %1951 = vmatpush1.bf16.msra.mxu0 %v1902
        %1952 = vmatprep.subr.bf16.mxu0 %v1899
        %1953 = vmatpush1.bf16.msra.mxu0 %v1898
        %1954 = vmatprep.subr.bf16.mxu0 %v1895
        %1955 = vmatpush1.bf16.msra.mxu0 %v1894
        %1956 = vmatprep.subr.bf16.mxu0 %v1891
        %1957 = vmatpush1.bf16.msra.mxu0 %v1890
        %1958 = vmatprep.subr.bf16.mxu0 %v1887
        %1959 = vmatpush1.bf16.msra.mxu0 %v1886
        %1960 = vmatprep.subr.bf16.mxu0 %v1883
        %1961 = vmatpush1.bf16.msra.mxu0 %v1882
        %1962 = vmatprep.subr.bf16.mxu0 0
        %1963 = vmatpush2.bf16.msra.mxu0 0
        %1964 = vmatprep.subr.bf16.mxu0 0
        %1965 = vmatpush2.bf16.msra.mxu0 0
        %1966 = vmatprep.subr.bf16.mxu0 0
        %1967 = vmatpush2.bf16.msra.mxu0 0
        %1968 = vmatprep.subr.bf16.mxu0 0
        %1969 = vmatpush2.bf16.msra.mxu0 0
        %1970 = vmatprep.subr.bf16.mxu0 0
        %1971 = vmatpush2.bf16.msra.mxu0 0
        %1972 = vmatprep.subr.bf16.mxu0 0
        %1973 = vmatpush2.bf16.msra.mxu0 0
        %1974 = vmatprep.subr.bf16.mxu0 0
        %1975 = vmatpush2.bf16.msra.mxu0 0
        %1976 = vmatprep.subr.bf16.mxu0 0
        %1977 = vmatpush2.bf16.msra.mxu0 0
        %1978 = vmatprep.mubr.bf16.mxu0 0
        %1979 = vmatmul.mubr.bf16.gmra.mxu0 %v1753
        %v1980 = vpop.f32.mrf.mxu0
        %v1981 = vadd.f32 0.0, %v1980
        %v1982 = vpop.f32.mrf.mxu0
        %v1983 = vadd.f32 0.0, %v1982
        %v1984 = vpop.f32.mrf.mxu0
        %v1985 = vpop.f32.mrf.mxu0
        %1986 = vdwg.mxu0
        %1987 = vmatprep.subr.bf16.mxu0 %v1913
        %1988 = vmatpush1.bf16.msra.mxu0 %v1912
        %1989 = vmatprep.subr.bf16.mxu0 %v1909
        %1990 = vmatpush1.bf16.msra.mxu0 %v1908
        %1991 = vmatprep.subr.bf16.mxu0 %v1905
        %1992 = vmatpush1.bf16.msra.mxu0 %v1904
        %1993 = vmatprep.subr.bf16.mxu0 %v1901
        %1994 = vmatpush1.bf16.msra.mxu0 %v1900
        %1995 = vmatprep.subr.bf16.mxu0 %v1897
        %1996 = vmatpush1.bf16.msra.mxu0 %v1896
        %1997 = vmatprep.subr.bf16.mxu0 %v1893
        %1998 = vmatpush1.bf16.msra.mxu0 %v1892
        %1999 = vmatprep.subr.bf16.mxu0 %v1889
        %2000 = vmatpush1.bf16.msra.mxu0 %v1888
        %2001 = vmatprep.subr.bf16.mxu0 %v1885
        %2002 = vmatpush1.bf16.msra.mxu0 %v1884
        %2003 = vmatprep.subr.bf16.mxu0 0
        %2004 = vmatpush2.bf16.msra.mxu0 0
        %2005 = vmatprep.subr.bf16.mxu0 0
        %2006 = vmatpush2.bf16.msra.mxu0 0
        %2007 = vmatprep.subr.bf16.mxu0 0
        %2008 = vmatpush2.bf16.msra.mxu0 0
        %2009 = vmatprep.subr.bf16.mxu0 0
        %2010 = vmatpush2.bf16.msra.mxu0 0
        %2011 = vmatprep.subr.bf16.mxu0 0
        %2012 = vmatpush2.bf16.msra.mxu0 0
        %2013 = vmatprep.subr.bf16.mxu0 0
        %2014 = vmatpush2.bf16.msra.mxu0 0
        %2015 = vmatprep.subr.bf16.mxu0 0
        %2016 = vmatpush2.bf16.msra.mxu0 0
        %2017 = vmatprep.subr.bf16.mxu0 0
        %2018 = vmatpush2.bf16.msra.mxu0 0
        %2019 = vmatprep.mubr.bf16.mxu0 0
        %2020 = vmatmul.mubr.bf16.gmra.mxu0 %v1753
        %v2021 = vpop.f32.mrf.mxu0
        %v2022 = vadd.f32 0.0, %v2021
        %v2023 = vpop.f32.mrf.mxu0
        %v2024 = vadd.f32 0.0, %v2023
        %v2025 = vpop.f32.mrf.mxu0
        %v2026 = vpop.f32.mrf.mxu0
        %2027 = vdwg.mxu0
        %v2028 = vxor.u32 %v1981, 2147483648
        %v2029 = vxor.u32 %v1983, 2147483648
        %v2030 = vmul.f32 %v2028, 1.442695
        %v2031 = vpow.pop %v2030
        %v2032 = vmul.f32 %v2029, 1.442695
        %v2033 = vpow.pop %v2032
        %v2034 = vadd.f32 %v2031, 1.0
        %v2035 = vadd.f32 %v2033, 1.0
        %v2036 = vrcp.pop %v2034
        %v2037 = vmul.f32 1.0, %v2036
        %v2038 = vrcp.pop %v2035
        %v2039 = vmul.f32 1.0, %v2038
        %v2040 = vmul.f32 %v1981, %v2037
        %v2041 = vmul.f32 %v1983, %v2039
        %v2042 = vmul.f32 %v2040, %v2022
        %v2043 = vmul.f32 %v2041, %v2024
        %v2044 = vpack.c.bf16 %v2042, %v2042
        %v2045 = vpack.c.bf16 %v2043, %v2043
        %v2046 = vld [vmem:[%s7] sm:$0xf]
        %v2047 = vld [vmem:[%s7 + $0x4] sm:$0xf]
        %v2048 = vld [vmem:[%s7 + $0x8] sm:$0xf]
        %v2049 = vld [vmem:[%s7 + $0xc] sm:$0xf]
        %v2050 = vld [vmem:[%s7 + $0x10] sm:$0xf]
        %v2051 = vld [vmem:[%s7 + $0x14] sm:$0xf]
        %v2052 = vld [vmem:[%s7 + $0x18] sm:$0xf]
        %v2053 = vld [vmem:[%s7 + $0x1c] sm:$0xf]
        %v2054 = vld [vmem:[%s7 + $0x20] sm:$0xf]
        %v2055 = vld [vmem:[%s7 + $0x24] sm:$0xf]
        %v2056 = vld [vmem:[%s7 + $0x28] sm:$0xf]
        %v2057 = vld [vmem:[%s7 + $0x2c] sm:$0xf]
        %v2058 = vld [vmem:[%s7 + $0x30] sm:$0xf]
        %v2059 = vld [vmem:[%s7 + $0x34] sm:$0xf]
        %v2060 = vld [vmem:[%s7 + $0x38] sm:$0xf]
        %v2061 = vld [vmem:[%s7 + $0x3c] sm:$0xf]
        %v2062 = vld [vmem:[%s7 + $0x40] sm:$0xf]
        %v2063 = vld [vmem:[%s7 + $0x44] sm:$0xf]
        %v2064 = vld [vmem:[%s7 + $0x48] sm:$0xf]
        %v2065 = vld [vmem:[%s7 + $0x4c] sm:$0xf]
        %v2066 = vld [vmem:[%s7 + $0x50] sm:$0xf]
        %v2067 = vld [vmem:[%s7 + $0x54] sm:$0xf]
        %v2068 = vld [vmem:[%s7 + $0x58] sm:$0xf]
        %v2069 = vld [vmem:[%s7 + $0x5c] sm:$0xf]
        %v2070 = vld [vmem:[%s7 + $0x60] sm:$0xf]
        %v2071 = vld [vmem:[%s7 + $0x64] sm:$0xf]
        %v2072 = vld [vmem:[%s7 + $0x68] sm:$0xf]
        %v2073 = vld [vmem:[%s7 + $0x6c] sm:$0xf]
        %v2074 = vld [vmem:[%s7 + $0x70] sm:$0xf]
        %v2075 = vld [vmem:[%s7 + $0x74] sm:$0xf]
        %v2076 = vld [vmem:[%s7 + $0x78] sm:$0xf]
        %v2077 = vld [vmem:[%s7 + $0x7c] sm:$0xf]
        %v2110 = vunpack.c.l.b16 %v2046
        %v2111 = vunpack.c.l.b16 %v2047
        %v2112 = vunpack.c.l.b16 %v2048
        %v2113 = vunpack.c.l.b16 %v2049
        %v2114 = vunpack.c.l.b16 %v2050
        %v2115 = vunpack.c.l.b16 %v2051
        %v2116 = vunpack.c.l.b16 %v2052
        %v2117 = vunpack.c.l.b16 %v2053
        %v2118 = vunpack.c.l.b16 %v2054
        %v2119 = vunpack.c.l.b16 %v2055
        %v2120 = vunpack.c.l.b16 %v2056
        %v2121 = vunpack.c.l.b16 %v2057
        %v2122 = vunpack.c.l.b16 %v2058
        %v2123 = vunpack.c.l.b16 %v2059
        %v2124 = vunpack.c.l.b16 %v2060
        %v2125 = vunpack.c.l.b16 %v2061
        %v2126 = vunpack.c.l.b16 %v2062
        %v2127 = vunpack.c.l.b16 %v2063
        %v2128 = vunpack.c.l.b16 %v2064
        %v2129 = vunpack.c.l.b16 %v2065
        %v2130 = vunpack.c.l.b16 %v2066
        %v2131 = vunpack.c.l.b16 %v2067
        %v2132 = vunpack.c.l.b16 %v2068
        %v2133 = vunpack.c.l.b16 %v2069
        %v2134 = vunpack.c.l.b16 %v2070
        %v2135 = vunpack.c.l.b16 %v2071
        %v2136 = vunpack.c.l.b16 %v2072
        %v2137 = vunpack.c.l.b16 %v2073
        %v2138 = vunpack.c.l.b16 %v2074
        %v2139 = vunpack.c.l.b16 %v2075
        %v2140 = vunpack.c.l.b16 %v2076
        %v2141 = vunpack.c.l.b16 %v2077
        %v2142 = vpack.c.b16 %v2111, %v2110
        %v2143 = vpack.c.b16 %v2113, %v2112
        %v2144 = vpack.c.b16 %v2115, %v2114
        %v2145 = vpack.c.b16 %v2117, %v2116
        %v2146 = vpack.c.b16 %v2119, %v2118
        %v2147 = vpack.c.b16 %v2121, %v2120
        %v2148 = vpack.c.b16 %v2123, %v2122
        %v2149 = vpack.c.b16 %v2125, %v2124
        %v2150 = vpack.c.b16 %v2127, %v2126
        %v2151 = vpack.c.b16 %v2129, %v2128
        %v2152 = vpack.c.b16 %v2131, %v2130
        %v2153 = vpack.c.b16 %v2133, %v2132
        %v2154 = vpack.c.b16 %v2135, %v2134
        %v2155 = vpack.c.b16 %v2137, %v2136
        %v2156 = vpack.c.b16 %v2139, %v2138
        %v2157 = vpack.c.b16 %v2141, %v2140
        %2174 = vmatprep.subr.bf16.mxu0 0
        %2175 = vmatpush1.bf16.msra.mxu0 %v2149
        %2176 = vmatprep.subr.bf16.mxu0 0
        %2177 = vmatpush1.bf16.msra.mxu0 %v2148
        %2178 = vmatprep.subr.bf16.mxu0 0
        %2179 = vmatpush1.bf16.msra.mxu0 %v2147
        %2180 = vmatprep.subr.bf16.mxu0 0
        %2181 = vmatpush1.bf16.msra.mxu0 %v2146
        %2182 = vmatprep.subr.bf16.mxu0 0
        %2183 = vmatpush1.bf16.msra.mxu0 %v2145
        %2184 = vmatprep.subr.bf16.mxu0 0
        %2185 = vmatpush1.bf16.msra.mxu0 %v2144
        %2186 = vmatprep.subr.bf16.mxu0 0
        %2187 = vmatpush1.bf16.msra.mxu0 %v2143
        %2188 = vmatprep.subr.bf16.mxu0 0
        %2189 = vmatpush1.bf16.msra.mxu0 %v2142
        %2190 = vmatprep.subr.bf16.mxu0 0
        %2191 = vmatpush2.bf16.msra.mxu0 %v2157
        %2192 = vmatprep.subr.bf16.mxu0 0
        %2193 = vmatpush2.bf16.msra.mxu0 %v2156
        %2194 = vmatprep.subr.bf16.mxu0 0
        %2195 = vmatpush2.bf16.msra.mxu0 %v2155
        %2196 = vmatprep.subr.bf16.mxu0 0
        %2197 = vmatpush2.bf16.msra.mxu0 %v2154
        %2198 = vmatprep.subr.bf16.mxu0 0
        %2199 = vmatpush2.bf16.msra.mxu0 %v2153
        %2200 = vmatprep.subr.bf16.mxu0 0
        %2201 = vmatpush2.bf16.msra.mxu0 %v2152
        %2202 = vmatprep.subr.bf16.mxu0 0
        %2203 = vmatpush2.bf16.msra.mxu0 %v2151
        %2204 = vmatprep.subr.bf16.mxu0 0
        %2205 = vmatpush2.bf16.msra.mxu0 %v2150
        %2206 = vmatprep.mubr.bf16.mxu0 %v2045
        %2207 = vmatmul.mubr.bf16.gmra.mxu0 %v2044
        %v2208 = vpop.f32.mrf.mxu0
        %v2209 = vadd.f32 0.0, %v2208
        %v2210 = vpop.f32.mrf.mxu0
        %v2211 = vpop.f32.mrf.mxu0
        %v2212 = vpop.f32.mrf.mxu0
        %2213 = vdwg.mxu0
        %v2214 = vadd.f32 %v1737, %v2209
        %2215 = vst [vmem:[%s389] sm:$0xff] %v2214
        %s2216 = sand.u32 %s262, 1
        %s2217 = scalar_lea.sflag [#allocation3], %s2216
        %s2218 = sand.u32 %s262, 1
        %s2219 = smul.addr %s2218, 8
        %s2220 = scalar_lea.vmem [#allocation2], %s2219
        // Predicated region
        $region61: #{llama_decoder_layer.1} parent=59 // pred_check
          %p2221 = pneg %p272
        $region62: #{llama_decoder_layer.1} parent=59 // pred_check_branch
          %2223 = sbr.rel (%p2221) target = $region64
        $region63: #{llama_decoder_layer.1} parent=59 // pred_region
          %s2225 = ssub.s32 128, 128
          %2226 = vsyncadd %s2217, %s2225
          %s2227 = smul.addr %s24, 128
          %s2228 = scalar_lea.hbm %s10, %s2227
          %s2230 = sshll.u32 %s2220, 4
          %s2231 = int_to_ptr.vmem [resolvable:$true] %s2230
          %2233 = dma.vmem_to_hbm [thread:$0]  %s2231, 128, %s2228, %s2217
        $region64: #{llama_decoder_layer.1} parent=59 // pred_fallthru
          _
      $region60: #{llama_decoder_layer.1} parent=5 // pred_fallthru
        _
      %p2234 = scmp.le.s32.totalorder 2, %s19
      // Predicated region
      $region65: #{llama_decoder_layer.1} parent=5 // pred_check
        %p2235 = pneg %p2234
      $region66: #{llama_decoder_layer.1} parent=5 // pred_check_branch
        %2237 = sbr.rel (%p2235) target = $region68
      $region67: #{llama_decoder_layer.1} parent=5 // pred_region
        %s2238 = ssub.s32 %s19, 2
        // Predicated region
        $region69: #{llama_decoder_layer.1} parent=67 // pred_check
          %p2239 = pneg %p278
        $region70: #{llama_decoder_layer.1} parent=67 // pred_check_branch
          %2241 = sbr.rel (%p2239) target = $region72
        $region71: #{llama_decoder_layer.1} parent=67 // pred_region
          %s2242 = sand.u32 %s263, 1
          %s2243 = scalar_lea.sflag [#allocation3], %s2242
          %s2244 = sand.u32 %s263, 1
          %s2245 = smul.addr %s2244, 8
          %s2246 = scalar_lea.vmem [#allocation2], %s2245
          %2247 = dma.done %s2243, 128
        $region72: #{llama_decoder_layer.1} parent=67 // pred_fallthru
          _
      $region68: #{llama_decoder_layer.1} parent=5 // pred_fallthru
        _
    $region6: #{llama_decoder_layer.1} parent=1 // loop_footer
      %s23 = sadd.s32 1, %s19
    $region7: #{llama_decoder_layer.1} parent=1 // loop_footer_branch
      %18 = sbr.rel target = $region3
    $region8: #{llama_decoder_layer.1} parent=1 // loop_exit
      _
    %2248 = vsyncpa [#allocation3], 1
    %s2249 = scalar_lea.sflag [#allocation3], 1
    %2250 = vsyncpa %s2249, 1

</llo_original>
